<compile_context>
chip_gen: v6e
topology: v6e:2x2x1
jax: 0.10.0
libtpu: 0.0.40
codegen_flags: <defaults>
</compile_context>

<pallas_src>
import math

import jax
import jax.numpy as jnp
from jax import lax
from jax.experimental import pallas as pl
from jax.experimental.pallas import tpu as pltpu

# ------------------------- PitchShift hyper-parameters -------------------------
SAMPLE_RATE = 16000
N_STEPS = 12                 # +1 octave -> rate = 0.5 (keeps the resample kernel tiny)
BINS_PER_OCTAVE = 12
N_FFT = 128
HOP = N_FFT // 4             # torchaudio default
WIN = N_FFT                  # torchaudio default
LOWPASS_WIDTH = 6            # torchaudio resample defaults (sinc_interp_hann)
ROLLOFF = 0.99
TWO_PI = 2.0 * math.pi

F_PAD = 128                  # n_freq (65) zero-padded to one lane-dense 128-wide block
ROW_TILE = 256               # frames per grid step (sublane tile)


def _round_up(x, m):
    return ((x + m - 1) // m) * m


# ------------------------------ Pallas kernels ---------------------------------
def _stft_kernel(frames_ref, dftw_ref, out_ref):
    # frames: [tm, n_fft]; dftw: [n_fft, 2*F_PAD] (hann window folded in, re|im blocks)
    out_ref[...] = jnp.dot(frames_ref[...], dftw_ref[...],
                           preferred_element_type=jnp.float32)


def _pv_kernel(z0_ref, z1_ref, alpha_ref, out_ref):
    # z0/z1: [tm, 2*F_PAD] packed (re | im), lane-aligned; alpha: [tm, 1]
    z0 = z0_ref[...]
    z1 = z1_ref[...]
    re0, im0 = z0[:, :F_PAD], z0[:, F_PAD:]
    re1, im1 = z1[:, :F_PAD], z1[:, F_PAD:]
    n0 = jnp.sqrt(re0 * re0 + im0 * im0)
    n1 = jnp.sqrt(re1 * re1 + im1 * im1)
    a = alpha_ref[...]
    mag = a * n1 + (1.0 - a) * n0
    # unit phasor of z1*conj(z0) == exp(i*(angle(z1)-angle(z0))).  torchaudio's
    # "- phase_advance, wrap to [-pi,pi], + phase_advance" only changes the angle by
    # multiples of 2*pi, which cancels exactly under exp(i*.), so no atan2/round/trig.
    pr = re1 * re0 + im1 * im0
    pi_ = im1 * re0 - re1 * im0
    pn = n0 * n1
    nz = pn > 0.0
    inv = 1.0 / jnp.maximum(pn, 1e-30)
    dre = jnp.where(nz, pr * inv, 1.0)        # angle(0) == 0 -> phasor (1, 0)
    dim = jnp.where(nz, pi_ * inv, 0.0)
    out_ref[...] = jnp.concatenate([mag, dre, dim], axis=1)   # [tm, 3*F_PAD]


def _istft_kernel(mag_ref, cre_ref, cim_ref, ifftw_ref, out_ref):
    # mag / cos(phase_acc) / sin(phase_acc): [tm, F_PAD]; ifftw: [2*F_PAD, n_fft]
    # (inverse-rDFT with synthesis window folded into the columns).
    mag = mag_ref[...]
    re = mag * cre_ref[...]
    im = mag * cim_ref[...]
    x = jnp.concatenate([re, im], axis=1)                     # K-stacked: [tm, 2*F_PAD]
    out_ref[...] = jnp.dot(x, ifftw_ref[...], preferred_element_type=jnp.float32)


def _resample_kernel(kern_ref, blocks_ref, out_ref):
    # kern: [new_g, kw]; blocks^T: [kw, tile_cols]  -> lane-dense output [new_g, tile_cols]
    out_ref[...] = jnp.dot(kern_ref[...], blocks_ref[...],
                           preferred_element_type=jnp.float32)


def _row_tiled_call(kernel, row_inputs, const_inputs, out_cols, tile_rows=ROW_TILE):
    """Tile the leading (rows/frames) axis over a 1-D parallel grid.

    row_inputs  : [rows, C_i] arrays, tiled along rows (double-buffered by BlockSpec).
    const_inputs: small matrices (DFT / inverse-DFT) passed as full blocks every step.
    Returns a single [rows, out_cols] float32 array.
    """
    rows = row_inputs[0].shape[0]
    tm = min(tile_rows, _round_up(rows, 8))
    rows_p = _round_up(rows, tm)
    if rows_p != rows:
        row_inputs = [jnp.pad(x, ((0, rows_p - rows), (0, 0))) for x in row_inputs]

    def row_spec(ncols):
        return pl.BlockSpec((tm, ncols), lambda i: (i, 0))

    def const_spec(shape):
        return pl.BlockSpec(tuple(shape), lambda i, _nd=len(shape): (0,) * _nd)

    out = pl.pallas_call(
        kernel,
        grid=(rows_p // tm,),
        in_specs=[row_spec(x.shape[1]) for x in row_inputs]
                 + [const_spec(c.shape) for c in const_inputs],
        out_specs=row_spec(out_cols),
        out_shape=jax.ShapeDtypeStruct((rows_p, out_cols), jnp.float32),
        compiler_params=pltpu.CompilerParams(
            dimension_semantics=("parallel",),
            vmem_limit_bytes=48 * 1024 * 1024),
    )(*row_inputs, *const_inputs)
    return out[:rows]


# ------------------------------ forward pass ------------------------------------
def apply_pitch_shift(audio, sample_rate=SAMPLE_RATE, n_steps=N_STEPS,
                      bins_per_octave=BINS_PER_OCTAVE, n_fft=N_FFT,
                      hop_length=HOP, win_length=WIN):
    B, T = audio.shape
    rate = 2.0 ** (-float(n_steps) / bins_per_octave)
    n_freq = n_fft // 2 + 1

    # hann window (torch.hann_window, periodic=True)
    window = (0.5 - 0.5 * jnp.cos(TWO_PI * jnp.arange(win_length) / win_length)
              ).astype(jnp.float32)

    # ---------------- STFT (center=True, reflect pad); one fused matmul ----------------
    pad = n_fft // 2
    xp = jnp.pad(audio, ((0, 0), (pad, pad)), mode="reflect")
    n_frames = 1 + (xp.shape[-1] - n_fft) // hop_length
    # TODO(synk): frame extraction is still an XLA gather (HBM-materialized); for large
    # B*T move the framing in-kernel (slice the padded waveform inside the STFT grid).
    frame_idx = jnp.arange(n_frames)[:, None] * hop_length + jnp.arange(n_fft)[None, :]
    frames = xp[:, frame_idx].reshape(B * n_frames, n_fft)            # [M, n_fft]

    nn_ = jnp.arange(n_fft, dtype=jnp.float32)[:, None]
    kk = jnp.arange(n_freq, dtype=jnp.float32)[None, :]
    ang = TWO_PI * nn_ * kk / n_fft
    dft_cos = jnp.pad(jnp.cos(ang), ((0, 0), (0, F_PAD - n_freq)))    # [n_fft, 128]
    dft_sin = jnp.pad(-jnp.sin(ang), ((0, 0), (0, F_PAD - n_freq)))   # [n_fft, 128]
    # TODO(synk): bf16 inputs (f32 accumulate) would further speed the MXU; kept f32
    # pending an end-to-end error check against the torch reference.
    dft_win = (window[:, None]
               * jnp.concatenate([dft_cos, dft_sin], axis=1)).astype(jnp.float32)

    spec = _row_tiled_call(_stft_kernel, [frames], [dft_win], 2 * F_PAD)
    spec = spec.reshape(B, n_frames, 2 * F_PAD)        # packed (re | im), lane-aligned

    # ---------------- phase vocoder (time stretch by `rate`) ----------------
    time_steps = jnp.arange(0.0, n_frames, rate, dtype=jnp.float32)
    n_out = int(time_steps.shape[0])
    alphas = jnp.mod(time_steps, 1.0)

    spec_p = jnp.pad(spec, ((0, 0), (0, 2), (0, 0)))   # torchaudio pads 2 frames
    idx0 = time_steps.astype(jnp.int32)
    z0 = jnp.take(spec_p, idx0, axis=1).reshape(B * n_out, 2 * F_PAD)
    z1 = jnp.take(spec_p, idx0 + 1, axis=1).reshape(B * n_out, 2 * F_PAD)
    alpha_col = jnp.broadcast_to(alphas[None, :, None], (B, n_out, 1)
                                 ).reshape(B * n_out, 1).astype(jnp.float32)

    pv = _row_tiled_call(_pv_kernel, [z0, z1, alpha_col], [], 3 * F_PAD)
    pv = pv.reshape(B, n_out, 3 * F_PAD)
    mag = pv[:, :, :F_PAD]
    dre = pv[:, :, F_PAD:2 * F_PAD]
    dim = pv[:, :, 2 * F_PAD:]

    # seed phasor = exp(i*angle(first frame)); the sequential cumsum of phases becomes
    # a complex cumprod of unit phasors (associative scan) -- no trig at runtime.
    re_f = spec[:, :1, :F_PAD]
    im_f = spec[:, :1, F_PAD:]
    n_f = jnp.sqrt(re_f * re_f + im_f * im_f)
    nz_f = n_f > 0.0
    seed_re = jnp.where(nz_f, re_f / jnp.maximum(n_f, 1e-30), 1.0)
    seed_im = jnp.where(nz_f, im_f / jnp.maximum(n_f, 1e-30), 0.0)

    p_re = jnp.concatenate([seed_re, dre[:, :-1, :]], axis=1)
    p_im = jnp.concatenate([seed_im, dim[:, :-1, :]], axis=1)

    def _cmul(a, b):
        ar, ai = a
        br, bi = b
        return (ar * br - ai * bi, ar * bi + ai * br)

    cre, cim = lax.associative_scan(_cmul, (p_re, p_im), axis=1)   # cos/sin(phase_acc)

    # ---------------- ISTFT (single K-stacked matmul, window folded in) ----------------
    kf = jnp.arange(n_freq)
    cscale = jnp.where((kf == 0) | (kf == n_fft // 2), 1.0, 2.0).astype(jnp.float32)
    ang_i = (TWO_PI * kf[:, None].astype(jnp.float32)
             * jnp.arange(n_fft, dtype=jnp.float32)[None, :] / n_fft)
    icos = cscale[:, None] * jnp.cos(ang_i) / n_fft
    isin = -cscale[:, None] * jnp.sin(ang_i) / n_fft
    # irfft ignores the imaginary part of the DC / Nyquist bins
    isin = isin.at[0, :].set(0.0).at[n_fft // 2, :].set(0.0)
    ifft_win = (jnp.concatenate(
        [jnp.pad(icos, ((0, F_PAD - n_freq), (0, 0))),
         jnp.pad(isin, ((0, F_PAD - n_freq), (0, 0)))], axis=0)
        * window[None, :]).astype(jnp.float32)                     # [256, n_fft]

    frames_t = _row_tiled_call(
        _istft_kernel,
        [mag.reshape(B * n_out, F_PAD),
         cre.reshape(B * n_out, F_PAD),
         cim.reshape(B * n_out, F_PAD)],
        [ifft_win], n_fft)
    frames_t = frames_t.reshape(B, n_out, n_fft)

    # overlap-add + squared-window envelope (torch NOLA check approximated by clamp)
    full_len = n_fft + hop_length * (n_out - 1)
    ola_idx = (jnp.arange(n_out)[:, None] * hop_length
               + jnp.arange(n_fft)[None, :]).reshape(-1)
    y = jnp.zeros((B, full_len), jnp.float32).at[:, ola_idx].add(frames_t.reshape(B, -1))
    env = jnp.zeros((full_len,), jnp.float32).at[ola_idx].add(
        jnp.tile(window * window, n_out))
    y = y / jnp.maximum(env, 1e-11)
    len_stretch = int(round(T / rate))
    y = y[:, pad: pad + len_stretch]

    # ---------------- resample int(sr/rate) -> sr (sinc_interp_hann) ----------------
    orig_freq = int(sample_rate / rate)
    new_freq = int(sample_rate)
    g = math.gcd(orig_freq, new_freq)
    orig_g, new_g = orig_freq // g, new_freq // g
    base_freq = min(orig_g, new_g) * ROLLOFF
    width = int(math.ceil(LOWPASS_WIDTH * orig_g / base_freq))
    kw = 2 * width + orig_g

    idx = jnp.arange(-width, width + orig_g, dtype=jnp.float32) / orig_g
    t = (-jnp.arange(new_g, dtype=jnp.float32) / new_g)[:, None] + idx[None, :]
    t = jnp.clip(t * base_freq, -LOWPASS_WIDTH, LOWPASS_WIDTH)
    win_sinc = jnp.cos(t * math.pi / LOWPASS_WIDTH / 2.0) ** 2
    tp = t * math.pi
    safe_tp = jnp.where(tp == 0, 1.0, tp)
    sinc_k = jnp.where(tp == 0, 1.0, jnp.sin(safe_tp) / safe_tp)
    sinc_k = (sinc_k * win_sinc * (base_freq / orig_g)).astype(jnp.float32)  # [new_g, kw]

    yp = jnp.pad(y, ((0, 0), (width, width + orig_g)))
    n_blocks = (yp.shape[-1] - kw) // orig_g + 1
    # TODO(synk): the im2col gather below still materializes kw x the waveform in HBM;
    # an in-kernel strided slice of yp would avoid it at larger sizes.
    blk_idx = jnp.arange(n_blocks)[:, None] * orig_g + jnp.arange(kw)[None, :]
    blocks_t = yp[:, blk_idx].transpose(2, 0, 1).reshape(kw, B * n_blocks)   # [kw, N]

    n_cols = B * n_blocks
    tile_c = min(4096, _round_up(n_cols, 128))
    n_cols_p = _round_up(n_cols, tile_c)
    if n_cols_p != n_cols:
        blocks_t = jnp.pad(blocks_t, ((0, 0), (0, n_cols_p - n_cols)))

    res_t = pl.pallas_call(
        _resample_kernel,
        grid=(n_cols_p // tile_c,),
        in_specs=[pl.BlockSpec((new_g, kw), lambda i: (0, 0)),
                  pl.BlockSpec((kw, tile_c), lambda i: (0, i))],
        out_specs=pl.BlockSpec((new_g, tile_c), lambda i: (0, i)),
        out_shape=jax.ShapeDtypeStruct((new_g, n_cols_p), jnp.float32),
        compiler_params=pltpu.CompilerParams(
            dimension_semantics=("parallel",),
            vmem_limit_bytes=48 * 1024 * 1024),
    )(sinc_k, blocks_t)

    res = (res_t[:, :n_cols].reshape(new_g, B, n_blocks)
           .transpose(1, 2, 0).reshape(B, n_blocks * new_g))
    target_len = int(math.ceil(new_freq * len_stretch / orig_freq))
    res = res[:, :target_len]

    # ---------------- trim / pad back to original length ----------------
    if res.shape[-1] > T:
        out = res[:, :T]
    else:
        out = jnp.pad(res, ((0, 0), (0, T - res.shape[-1])))
    return out


apply_pitch_shift_jit = jax.jit(apply_pitch_shift)


if __name__ == "__main__":
    key = jax.random.PRNGKey(0)
    B, T = 2, 1024
    audio_waveform = jax.random.normal(key, (B, T), dtype=jnp.float32)

    out = apply_pitch_shift_jit(audio_waveform)
    out = jax.block_until_ready(out)

    assert out.shape == (B, T), out.shape
    assert out.dtype == jnp.float32
    assert bool(jnp.all(jnp.isfinite(out)))
    print("KERNEL_OK")
</pallas_src>

<mosaic_0001>
module attributes {stable_mosaic.version = 11 : i64} {
  func.func private @main(%arg0: i32) attributes {dimension_semantics = [#tpu.dimension_semantics<core_parallel>], iteration_bounds = array<i64: 2>, tpu.core_type = #tpu.core_type<sc_scalar_subcore>, window_params = []} {
    return
  }
}

module attributes {stable_mosaic.version = 11 : i64} {
  func.func private @main(%arg0: i32) attributes {dimension_semantics = [#tpu.dimension_semantics<core_parallel>], iteration_bounds = array<i64: 2>, tpu.core_type = #tpu.core_type<sc_scalar_subcore>, window_params = []} {
    return
  }
}

module attributes {stable_mosaic.version = 11 : i64} {
  func.func @_stft_kernel(%arg0: i32, %arg1: memref<72x128xf32, #tpu.memory_space<vmem>>, %arg2: memref<128x256xf32, #tpu.memory_space<vmem>>, %arg3: memref<72x256xf32, #tpu.memory_space<vmem>>) attributes {dimension_semantics = [#tpu.dimension_semantics<parallel>], iteration_bounds = array<i64: 1>, scalar_prefetch = 0 : i64, scratch_operands = 0 : i64, tpu.core_type = #tpu.core_type<tc>, window_params = [{transform_indices = @transform_0, window_bounds = array<i64: 72, 128>}, {pipeline_mode = #tpu.pipeline_mode<synchronous>, transform_indices = @transform_1, window_bounds = array<i64: 128, 256>}, {transform_indices = @transform_2, window_bounds = array<i64: 72, 256>}]} {
    %c0 = arith.constant 0 : index
    %c0_0 = arith.constant 0 : index
    %0 = vector.load %arg1[%c0, %c0_0] : memref<72x128xf32, #tpu.memory_space<vmem>>, vector<72x128xf32>
    %c0_1 = arith.constant 0 : index
    %c0_2 = arith.constant 0 : index
    %1 = vector.load %arg2[%c0_1, %c0_2] : memref<128x256xf32, #tpu.memory_space<vmem>>, vector<128x256xf32>
    %cst = arith.constant dense<0.000000e+00> : vector<72x256xf32>
    %2 = tpu.matmul %0, %1, %cst {dimension_numbers = #tpu.dot_dimension_numbers<[1], [0], [0], [1], [0, 0, 1, 1], [], []>} : vector<72x128xf32>, vector<128x256xf32>, vector<72x256xf32> -> vector<72x256xf32>
    %c0_3 = arith.constant 0 : index
    %c0_4 = arith.constant 0 : index
    %3 = vector.load %arg3[%c0_3, %c0_4] : memref<72x256xf32, #tpu.memory_space<vmem>>, vector<72x256xf32>
    tpu.vector_store %arg3[%c0_3, %c0_4], %2 {strides = array<i32>} : memref<72x256xf32, #tpu.memory_space<vmem>>, vector<72x256xf32>,
    return
  }
  func.func @transform_0(%arg0: i32) -> (i32, i32) {
    %c0_i32 = arith.constant 0 : i32
    %c0_i32_0 = arith.constant 0 : i32
    return %arg0, %c0_i32 : i32, i32
  }
  func.func @transform_1(%arg0: i32) -> (i32, i32) {
    %c0_i32 = arith.constant 0 : i32
    %c0_i32_0 = arith.constant 0 : i32
    %c0_i32_1 = arith.constant 0 : i32
    return %c0_i32, %c0_i32_0 : i32, i32
  }
  func.func @transform_2(%arg0: i32) -> (i32, i32) {
    %c0_i32 = arith.constant 0 : i32
    %c0_i32_0 = arith.constant 0 : i32
    return %arg0, %c0_i32 : i32, i32
  }
}

module attributes {stable_mosaic.version = 11 : i64} {
  func.func @_pv_kernel(%arg0: i32, %arg1: memref<136x256xf32, #tpu.memory_space<vmem>>, %arg2: memref<136x256xf32, #tpu.memory_space<vmem>>, %arg3: memref<136x1xf32, #tpu.memory_space<vmem>>, %arg4: memref<136x384xf32, #tpu.memory_space<vmem>>) attributes {dimension_semantics = [#tpu.dimension_semantics<parallel>], iteration_bounds = array<i64: 1>, scalar_prefetch = 0 : i64, scratch_operands = 0 : i64, tpu.core_type = #tpu.core_type<tc>, window_params = [{transform_indices = @transform_0, window_bounds = array<i64: 136, 256>}, {transform_indices = @transform_1, window_bounds = array<i64: 136, 256>}, {transform_indices = @transform_2, window_bounds = array<i64: 136, 1>}, {transform_indices = @transform_3, window_bounds = array<i64: 136, 384>}]} {
    %c0 = arith.constant 0 : index
    %c0_0 = arith.constant 0 : index
    %0 = vector.load %arg1[%c0, %c0_0] : memref<136x256xf32, #tpu.memory_space<vmem>>, vector<136x256xf32>
    %c0_1 = arith.constant 0 : index
    %c0_2 = arith.constant 0 : index
    %1 = vector.load %arg2[%c0_1, %c0_2] : memref<136x256xf32, #tpu.memory_space<vmem>>, vector<136x256xf32>
    %2 = vector.extract_strided_slice %0 {offsets = [0, 0], sizes = [136, 128], strides = [1, 1]} : vector<136x256xf32> to vector<136x128xf32>
    %3 = vector.extract_strided_slice %0 {offsets = [0, 128], sizes = [136, 128], strides = [1, 1]} : vector<136x256xf32> to vector<136x128xf32>
    %4 = vector.extract_strided_slice %1 {offsets = [0, 0], sizes = [136, 128], strides = [1, 1]} : vector<136x256xf32> to vector<136x128xf32>
    %5 = vector.extract_strided_slice %1 {offsets = [0, 128], sizes = [136, 128], strides = [1, 1]} : vector<136x256xf32> to vector<136x128xf32>
    %6 = arith.mulf %2, %2 : vector<136x128xf32>
    %7 = arith.mulf %3, %3 : vector<136x128xf32>
    %8 = arith.addf %6, %7 : vector<136x128xf32>
    %9 = math.sqrt %8 : vector<136x128xf32>
    %10 = arith.mulf %4, %4 : vector<136x128xf32>
    %11 = arith.mulf %5, %5 : vector<136x128xf32>
    %12 = arith.addf %10, %11 : vector<136x128xf32>
    %13 = math.sqrt %12 : vector<136x128xf32>
    %c0_3 = arith.constant 0 : index
    %c0_4 = arith.constant 0 : index
    %14 = vector.load %arg3[%c0_3, %c0_4] : memref<136x1xf32, #tpu.memory_space<vmem>>, vector<136x1xf32>
    %15 = vector.broadcast %14 : vector<136x1xf32> to vector<136x128xf32>
    %16 = arith.mulf %15, %13 : vector<136x128xf32>
    %cst = arith.constant 1.000000e+00 : f32
    %17 = vector.broadcast %cst : f32 to vector<136x1xf32>
    %18 = arith.subf %17, %14 : vector<136x1xf32>
    %19 = vector.broadcast %18 : vector<136x1xf32> to vector<136x128xf32>
    %20 = arith.mulf %19, %9 : vector<136x128xf32>
    %21 = arith.addf %16, %20 : vector<136x128xf32>
    %22 = arith.mulf %4, %2 : vector<136x128xf32>
    %23 = arith.mulf %5, %3 : vector<136x128xf32>
    %24 = arith.addf %22, %23 : vector<136x128xf32>
    %25 = arith.mulf %5, %2 : vector<136x128xf32>
    %26 = arith.mulf %4, %3 : vector<136x128xf32>
    %27 = arith.subf %25, %26 : vector<136x128xf32>
    %28 = arith.mulf %9, %13 : vector<136x128xf32>
    %cst_5 = arith.constant 0.000000e+00 : f32
    %29 = vector.broadcast %cst_5 : f32 to vector<136x128xf32>
    %30 = arith.cmpf ogt, %28, %29 : vector<136x128xf32>
    %cst_6 = arith.constant 1.000000e-30 : f32
    %31 = vector.broadcast %cst_6 : f32 to vector<136x128xf32>
    %32 = arith.maximumf %28, %31 : vector<136x128xf32>
    %cst_7 = arith.constant 1.000000e+00 : f32
    %33 = vector.broadcast %cst_7 : f32 to vector<136x128xf32>
    %34 = arith.divf %33, %32 : vector<136x128xf32>
    %35 = arith.mulf %24, %34 : vector<136x128xf32>
    %cst_8 = arith.constant 1.000000e+00 : f32
    %36 = vector.broadcast %cst_8 : f32 to vector<136x128xf32>
    %37 = arith.select %30, %35, %36 : vector<136x128xi1>, vector<136x128xf32>
    %38 = arith.mulf %27, %34 : vector<136x128xf32>
    %cst_9 = arith.constant 0.000000e+00 : f32
    %39 = vector.broadcast %cst_9 : f32 to vector<136x128xf32>
    %40 = arith.select %30, %38, %39 : vector<136x128xi1>, vector<136x128xf32>
    %41 = tpu.concatenate %21, %37, %40 in 1 : vector<136x128xf32>, vector<136x128xf32>, vector<136x128xf32> -> vector<136x384xf32>
    %c0_10 = arith.constant 0 : index
    %c0_11 = arith.constant 0 : index
    %42 = vector.load %arg4[%c0_10, %c0_11] : memref<136x384xf32, #tpu.memory_space<vmem>>, vector<136x384xf32>
    tpu.vector_store %arg4[%c0_10, %c0_11], %41 {strides = array<i32>} : memref<136x384xf32, #tpu.memory_space<vmem>>, vector<136x384xf32>,
    return
  }
  func.func @transform_0(%arg0: i32) -> (i32, i32) {
    %c0_i32 = arith.constant 0 : i32
    %c0_i32_0 = arith.constant 0 : i32
    return %arg0, %c0_i32 : i32, i32
  }
  func.func @transform_1(%arg0: i32) -> (i32, i32) {
    %c0_i32 = arith.constant 0 : i32
    %c0_i32_0 = arith.constant 0 : i32
    return %arg0, %c0_i32 : i32, i32
  }
  func.func @transform_2(%arg0: i32) -> (i32, i32) {
    %c0_i32 = arith.constant 0 : i32
    %c0_i32_0 = arith.constant 0 : i32
    return %arg0, %c0_i32 : i32, i32
  }
  func.func @transform_3(%arg0: i32) -> (i32, i32) {
    %c0_i32 = arith.constant 0 : i32
    %c0_i32_0 = arith.constant 0 : i32
    return %arg0, %c0_i32 : i32, i32
  }
}

module attributes {stable_mosaic.version = 11 : i64} {
  func.func @_istft_kernel(%arg0: i32, %arg1: memref<136x128xf32, #tpu.memory_space<vmem>>, %arg2: memref<136x128xf32, #tpu.memory_space<vmem>>, %arg3: memref<136x128xf32, #tpu.memory_space<vmem>>, %arg4: memref<256x128xf32, #tpu.memory_space<vmem>>, %arg5: memref<136x128xf32, #tpu.memory_space<vmem>>) attributes {dimension_semantics = [#tpu.dimension_semantics<parallel>], iteration_bounds = array<i64: 1>, scalar_prefetch = 0 : i64, scratch_operands = 0 : i64, tpu.core_type = #tpu.core_type<tc>, window_params = [{transform_indices = @transform_0, window_bounds = array<i64: 136, 128>}, {transform_indices = @transform_1, window_bounds = array<i64: 136, 128>}, {transform_indices = @transform_2, window_bounds = array<i64: 136, 128>}, {pipeline_mode = #tpu.pipeline_mode<synchronous>, transform_indices = @transform_3, window_bounds = array<i64: 256, 128>}, {transform_indices = @transform_4, window_bounds = array<i64: 136, 128>}]} {
    %c0 = arith.constant 0 : index
    %c0_0 = arith.constant 0 : index
    %0 = vector.load %arg1[%c0, %c0_0] : memref<136x128xf32, #tpu.memory_space<vmem>>, vector<136x128xf32>
    %c0_1 = arith.constant 0 : index
    %c0_2 = arith.constant 0 : index
    %1 = vector.load %arg2[%c0_1, %c0_2] : memref<136x128xf32, #tpu.memory_space<vmem>>, vector<136x128xf32>
    %2 = arith.mulf %0, %1 : vector<136x128xf32>
    %c0_3 = arith.constant 0 : index
    %c0_4 = arith.constant 0 : index
    %3 = vector.load %arg3[%c0_3, %c0_4] : memref<136x128xf32, #tpu.memory_space<vmem>>, vector<136x128xf32>
    %4 = arith.mulf %0, %3 : vector<136x128xf32>
    %5 = tpu.concatenate %2, %4 in 1 : vector<136x128xf32>, vector<136x128xf32> -> vector<136x256xf32>
    %c0_5 = arith.constant 0 : index
    %c0_6 = arith.constant 0 : index
    %6 = vector.load %arg4[%c0_5, %c0_6] : memref<256x128xf32, #tpu.memory_space<vmem>>, vector<256x128xf32>
    %cst = arith.constant dense<0.000000e+00> : vector<136x128xf32>
    %7 = tpu.matmul %5, %6, %cst {dimension_numbers = #tpu.dot_dimension_numbers<[1], [0], [0], [1], [0, 0, 1, 1], [], []>} : vector<136x256xf32>, vector<256x128xf32>, vector<136x128xf32> -> vector<136x128xf32>
    %c0_7 = arith.constant 0 : index
    %c0_8 = arith.constant 0 : index
    %8 = vector.load %arg5[%c0_7, %c0_8] : memref<136x128xf32, #tpu.memory_space<vmem>>, vector<136x128xf32>
    tpu.vector_store %arg5[%c0_7, %c0_8], %7 {strides = array<i32>} : memref<136x128xf32, #tpu.memory_space<vmem>>, vector<136x128xf32>,
    return
  }
  func.func @transform_0(%arg0: i32) -> (i32, i32) {
    %c0_i32 = arith.constant 0 : i32
    %c0_i32_0 = arith.constant 0 : i32
    return %arg0, %c0_i32 : i32, i32
  }
  func.func @transform_1(%arg0: i32) -> (i32, i32) {
    %c0_i32 = arith.constant 0 : i32
    %c0_i32_0 = arith.constant 0 : i32
    return %arg0, %c0_i32 : i32, i32
  }
  func.func @transform_2(%arg0: i32) -> (i32, i32) {
    %c0_i32 = arith.constant 0 : i32
    %c0_i32_0 = arith.constant 0 : i32
    return %arg0, %c0_i32 : i32, i32
  }
  func.func @transform_3(%arg0: i32) -> (i32, i32) {
    %c0_i32 = arith.constant 0 : i32
    %c0_i32_0 = arith.constant 0 : i32
    %c0_i32_1 = arith.constant 0 : i32
    return %c0_i32, %c0_i32_0 : i32, i32
  }
  func.func @transform_4(%arg0: i32) -> (i32, i32) {
    %c0_i32 = arith.constant 0 : i32
    %c0_i32_0 = arith.constant 0 : i32
    return %arg0, %c0_i32 : i32, i32
  }
}

module attributes {stable_mosaic.version = 11 : i64} {
  func.func @_resample_kernel(%arg0: i32, %arg1: memref<1x28xf32, #tpu.memory_space<vmem>>, %arg2: memref<28x2176xf32, #tpu.memory_space<vmem>>, %arg3: memref<1x2176xf32, #tpu.memory_space<vmem>>) attributes {dimension_semantics = [#tpu.dimension_semantics<parallel>], iteration_bounds = array<i64: 1>, scalar_prefetch = 0 : i64, scratch_operands = 0 : i64, tpu.core_type = #tpu.core_type<tc>, window_params = [{pipeline_mode = #tpu.pipeline_mode<synchronous>, transform_indices = @transform_0, window_bounds = array<i64: 1, 28>}, {transform_indices = @transform_1, window_bounds = array<i64: 28, 2176>}, {transform_indices = @transform_2, window_bounds = array<i64: 1, 2176>}]} {
    %c0 = arith.constant 0 : index
    %c0_0 = arith.constant 0 : index
    %0 = vector.load %arg1[%c0, %c0_0] : memref<1x28xf32, #tpu.memory_space<vmem>>, vector<1x28xf32>
    %c0_1 = arith.constant 0 : index
    %c0_2 = arith.constant 0 : index
    %1 = vector.load %arg2[%c0_1, %c0_2] : memref<28x2176xf32, #tpu.memory_space<vmem>>, vector<28x2176xf32>
    %cst = arith.constant dense<0.000000e+00> : vector<1x2176xf32>
    %2 = tpu.matmul %0, %1, %cst {dimension_numbers = #tpu.dot_dimension_numbers<[1], [0], [0], [1], [0, 0, 1, 1], [], []>} : vector<1x28xf32>, vector<28x2176xf32>, vector<1x2176xf32> -> vector<1x2176xf32>
    %c0_3 = arith.constant 0 : index
    %c0_4 = arith.constant 0 : index
    %3 = vector.load %arg3[%c0_3, %c0_4] : memref<1x2176xf32, #tpu.memory_space<vmem>>, vector<1x2176xf32>
    tpu.vector_store %arg3[%c0_3, %c0_4], %2 {strides = array<i32>} : memref<1x2176xf32, #tpu.memory_space<vmem>>, vector<1x2176xf32>,
    return
  }
  func.func @transform_0(%arg0: i32) -> (i32, i32) {
    %c0_i32 = arith.constant 0 : i32
    %c0_i32_0 = arith.constant 0 : i32
    %c0_i32_1 = arith.constant 0 : i32
    return %c0_i32, %c0_i32_0 : i32, i32
  }
  func.func @transform_1(%arg0: i32) -> (i32, i32) {
    %c0_i32 = arith.constant 0 : i32
    %c0_i32_0 = arith.constant 0 : i32
    return %c0_i32, %arg0 : i32, i32
  }
  func.func @transform_2(%arg0: i32) -> (i32, i32) {
    %c0_i32 = arith.constant 0 : i32
    %c0_i32_0 = arith.constant 0 : i32
    return %c0_i32, %arg0 : i32, i32
  }
}

</mosaic_0001>

<llo_original>
// kernel: apply_pitch_shift.4
$region0: #{apply_pitch_shift.4}
  #allocation0 [shape = 'u32[]', space=smem, size = 0x4, offset = 0x4, fixed_abs, tag = 'smem constant byte address 0x4 - core index']
  #allocation1 [shape = 'u32[144,128]{1,0:T(1,128)}', space=vmem, size = 0x12000, scoped, tag = 'internal scratch']
  %s0 = inlined_call_operand.vmem [shape: f32[72,128], index: 0, kind: input, shape index: {}]
  %s1 = inlined_call_operand.vmem [shape: f32[128,256], index: 1, kind: input, shape index: {}]
  %s2 = inlined_call_operand.vmem [shape: f32[72,256], index: 2, kind: output, shape index: {}]
  %s3 = sld [smem:[#allocation0]]
  $region18: #{apply_pitch_shift.4} parent=0
    _
  %s5 = ssub.s32 1, %s3
  %s6 = scalar_select 0, %s5, %s3
  // Predicated region
  $region2: #{apply_pitch_shift.4} parent=0 // pred_check
    _
  $region3: #{apply_pitch_shift.4} parent=0 // pred_check_branch
    %8 = sbr.rel (0) target = $region5
  $region4: #{apply_pitch_shift.4} parent=0 // pred_region
    _
  $region5: #{apply_pitch_shift.4} parent=0 // pred_fallthru
    _
  // Predicated region
  $region6: #{apply_pitch_shift.4} parent=0 // pred_check
    _
  $region7: #{apply_pitch_shift.4} parent=0 // pred_check_branch
    %10 = sbr.rel (0) target = $region9
  $region8: #{apply_pitch_shift.4} parent=0 // pred_region
    _
  $region9: #{apply_pitch_shift.4} parent=0 // pred_fallthru
    _
  %v11 = vld [vmem:[%s0] sm:$0xff]
  %v12 = vld [vmem:[%s0 + $0x8] sm:$0xff]
  %v13 = vld [vmem:[%s0 + $0x10] sm:$0xff]
  %v14 = vld [vmem:[%s0 + $0x18] sm:$0xff]
  %v15 = vld [vmem:[%s0 + $0x20] sm:$0xff]
  %v16 = vld [vmem:[%s0 + $0x28] sm:$0xff]
  %v17 = vld [vmem:[%s0 + $0x30] sm:$0xff]
  %v18 = vld [vmem:[%s0 + $0x38] sm:$0xff]
  %v19 = vld [vmem:[%s0 + $0x40] sm:$0xff]
  %v20 = vld [vmem:[%s1] sm:$0xff]
  %v21 = vld [vmem:[%s1 + $0x8] sm:$0xff]
  %v22 = vld [vmem:[%s1 + $0x10] sm:$0xff]
  %v23 = vld [vmem:[%s1 + $0x18] sm:$0xff]
  %v24 = vld [vmem:[%s1 + $0x20] sm:$0xff]
  %v25 = vld [vmem:[%s1 + $0x28] sm:$0xff]
  %v26 = vld [vmem:[%s1 + $0x30] sm:$0xff]
  %v27 = vld [vmem:[%s1 + $0x38] sm:$0xff]
  %v28 = vld [vmem:[%s1 + $0x40] sm:$0xff]
  %v29 = vld [vmem:[%s1 + $0x48] sm:$0xff]
  %v30 = vld [vmem:[%s1 + $0x50] sm:$0xff]
  %v31 = vld [vmem:[%s1 + $0x58] sm:$0xff]
  %v32 = vld [vmem:[%s1 + $0x60] sm:$0xff]
  %v33 = vld [vmem:[%s1 + $0x68] sm:$0xff]
  %v34 = vld [vmem:[%s1 + $0x70] sm:$0xff]
  %v35 = vld [vmem:[%s1 + $0x78] sm:$0xff]
  %v36 = vld [vmem:[%s1 + $0x80] sm:$0xff]
  %v37 = vld [vmem:[%s1 + $0x88] sm:$0xff]
  %v38 = vld [vmem:[%s1 + $0x90] sm:$0xff]
  %v39 = vld [vmem:[%s1 + $0x98] sm:$0xff]
  %v40 = vld [vmem:[%s1 + $0xa0] sm:$0xff]
  %v41 = vld [vmem:[%s1 + $0xa8] sm:$0xff]
  %v42 = vld [vmem:[%s1 + $0xb0] sm:$0xff]
  %v43 = vld [vmem:[%s1 + $0xb8] sm:$0xff]
  %v44 = vld [vmem:[%s1 + $0xc0] sm:$0xff]
  %v45 = vld [vmem:[%s1 + $0xc8] sm:$0xff]
  %v46 = vld [vmem:[%s1 + $0xd0] sm:$0xff]
  %v47 = vld [vmem:[%s1 + $0xd8] sm:$0xff]
  %v48 = vld [vmem:[%s1 + $0xe0] sm:$0xff]
  %v49 = vld [vmem:[%s1 + $0xe8] sm:$0xff]
  %v50 = vld [vmem:[%s1 + $0xf0] sm:$0xff]
  %v51 = vld [vmem:[%s1 + $0xf8] sm:$0xff]
  %52 = vmatprep.subr.mxu0 %v51
  %53 = vmatpush1.msra.mxu0 %v50
  %54 = vmatprep.subr.mxu0 %v49
  %55 = vmatpush1.msra.mxu0 %v48
  %56 = vmatprep.subr.mxu0 %v47
  %57 = vmatpush1.msra.mxu0 %v46
  %58 = vmatprep.subr.mxu0 %v45
  %59 = vmatpush1.msra.mxu0 %v44
  %60 = vmatprep.subr.mxu0 %v43
  %61 = vmatpush1.msra.mxu0 %v42
  %62 = vmatprep.subr.mxu0 %v41
  %63 = vmatpush1.msra.mxu0 %v40
  %64 = vmatprep.subr.mxu0 %v39
  %65 = vmatpush1.msra.mxu0 %v38
  %66 = vmatprep.subr.mxu0 %v37
  %67 = vmatpush1.msra.mxu0 %v36
  %68 = vmatprep.subr.mxu0 %v35
  %69 = vmatpush1.msra.mxu0 %v34
  %70 = vmatprep.subr.mxu0 %v33
  %71 = vmatpush1.msra.mxu0 %v32
  %72 = vmatprep.subr.mxu0 %v31
  %73 = vmatpush1.msra.mxu0 %v30
  %74 = vmatprep.subr.mxu0 %v29
  %75 = vmatpush1.msra.mxu0 %v28
  %76 = vmatprep.subr.mxu0 %v27
  %77 = vmatpush1.msra.mxu0 %v26
  %78 = vmatprep.subr.mxu0 %v25
  %79 = vmatpush1.msra.mxu0 %v24
  %80 = vmatprep.subr.mxu0 %v23
  %81 = vmatpush1.msra.mxu0 %v22
  %82 = vmatprep.subr.mxu0 %v21
  %83 = vmatpush1.msra.mxu0 %v20
  %84 = vmatprep.subr.mxu0 0.0
  %85 = vmatpush2.msra.mxu0 0.0
  %86 = vmatprep.subr.mxu0 0.0
  %87 = vmatpush2.msra.mxu0 0.0
  %88 = vmatprep.subr.mxu0 0.0
  %89 = vmatpush2.msra.mxu0 0.0
  %90 = vmatprep.subr.mxu0 0.0
  %91 = vmatpush2.msra.mxu0 0.0
  %92 = vmatprep.subr.mxu0 0.0
  %93 = vmatpush2.msra.mxu0 0.0
  %94 = vmatprep.subr.mxu0 0.0
  %95 = vmatpush2.msra.mxu0 0.0
  %96 = vmatprep.subr.mxu0 0.0
  %97 = vmatpush2.msra.mxu0 0.0
  %98 = vmatprep.subr.mxu0 0.0
  %99 = vmatpush2.msra.mxu0 0.0
  %100 = vmatprep.subr.mxu0 0.0
  %101 = vmatpush2.msra.mxu0 0.0
  %102 = vmatprep.subr.mxu0 0.0
  %103 = vmatpush2.msra.mxu0 0.0
  %104 = vmatprep.subr.mxu0 0.0
  %105 = vmatpush2.msra.mxu0 0.0
  %106 = vmatprep.subr.mxu0 0.0
  %107 = vmatpush2.msra.mxu0 0.0
  %108 = vmatprep.subr.mxu0 0.0
  %109 = vmatpush2.msra.mxu0 0.0
  %110 = vmatprep.subr.mxu0 0.0
  %111 = vmatpush2.msra.mxu0 0.0
  %112 = vmatprep.subr.mxu0 0.0
  %113 = vmatpush2.msra.mxu0 0.0
  %114 = vmatprep.subr.mxu0 0.0
  %115 = vmatpush2.msra.mxu0 0.0
  %116 = vmatprep.mubr.f32.mxu0 0.0
  %117 = vmatmul.mubr.f32.gmra.mxu0 %v11
  %v118 = vpop.f32.mrf.mxu0
  %v119 = vadd.f32 0.0, %v118
  %v120 = vpop.f32.mrf.mxu0
  %v121 = vadd.f32 0.0, %v120
  %122 = vmatprep.mubr.f32.mxu0 0.0
  %123 = vmatmul.mubr.f32.gmra.mxu0 %v12
  %v124 = vpop.f32.mrf.mxu0
  %v125 = vadd.f32 0.0, %v124
  %v126 = vpop.f32.mrf.mxu0
  %v127 = vadd.f32 0.0, %v126
  %128 = vmatprep.mubr.f32.mxu0 0.0
  %129 = vmatmul.mubr.f32.gmra.mxu0 %v13
  %v130 = vpop.f32.mrf.mxu0
  %v131 = vadd.f32 0.0, %v130
  %v132 = vpop.f32.mrf.mxu0
  %v133 = vadd.f32 0.0, %v132
  %134 = vmatprep.mubr.f32.mxu0 0.0
  %135 = vmatmul.mubr.f32.gmra.mxu0 %v14
  %v136 = vpop.f32.mrf.mxu0
  %v137 = vadd.f32 0.0, %v136
  %v138 = vpop.f32.mrf.mxu0
  %v139 = vadd.f32 0.0, %v138
  %140 = vmatprep.mubr.f32.mxu0 0.0
  %141 = vmatmul.mubr.f32.gmra.mxu0 %v15
  %v142 = vpop.f32.mrf.mxu0
  %v143 = vadd.f32 0.0, %v142
  %v144 = vpop.f32.mrf.mxu0
  %v145 = vadd.f32 0.0, %v144
  %146 = vmatprep.mubr.f32.mxu0 0.0
  %147 = vmatmul.mubr.f32.gmra.mxu0 %v16
  %v148 = vpop.f32.mrf.mxu0
  %v149 = vadd.f32 0.0, %v148
  %v150 = vpop.f32.mrf.mxu0
  %v151 = vadd.f32 0.0, %v150
  %152 = vmatprep.mubr.f32.mxu0 0.0
  %153 = vmatmul.mubr.f32.gmra.mxu0 %v17
  %v154 = vpop.f32.mrf.mxu0
  %v155 = vadd.f32 0.0, %v154
  %v156 = vpop.f32.mrf.mxu0
  %v157 = vadd.f32 0.0, %v156
  %158 = vmatprep.mubr.f32.mxu0 0.0
  %159 = vmatmul.mubr.f32.gmra.mxu0 %v18
  %v160 = vpop.f32.mrf.mxu0
  %v161 = vadd.f32 0.0, %v160
  %v162 = vpop.f32.mrf.mxu0
  %v163 = vadd.f32 0.0, %v162
  %164 = vmatprep.mubr.f32.mxu0 0.0
  %165 = vmatmul.mubr.f32.gmra.mxu0 %v19
  %v166 = vpop.f32.mrf.mxu0
  %v167 = vadd.f32 0.0, %v166
  %v168 = vpop.f32.mrf.mxu0
  %v169 = vadd.f32 0.0, %v168
  %170 = vdwg.mxu0
  %171 = vst [vmem:[%s2] sm:$0xff] %v119
  %172 = vst [vmem:[%s2 + $0x8] sm:$0xff] %v121
  %173 = vst [vmem:[%s2 + $0x10] sm:$0xff] %v125
  %174 = vst [vmem:[%s2 + $0x18] sm:$0xff] %v127
  %175 = vst [vmem:[%s2 + $0x20] sm:$0xff] %v131
  %176 = vst [vmem:[%s2 + $0x28] sm:$0xff] %v133
  %177 = vst [vmem:[%s2 + $0x30] sm:$0xff] %v137
  %178 = vst [vmem:[%s2 + $0x38] sm:$0xff] %v139
  %179 = vst [vmem:[%s2 + $0x40] sm:$0xff] %v143
  %180 = vst [vmem:[%s2 + $0x48] sm:$0xff] %v145
  %181 = vst [vmem:[%s2 + $0x50] sm:$0xff] %v149
  %182 = vst [vmem:[%s2 + $0x58] sm:$0xff] %v151
  %183 = vst [vmem:[%s2 + $0x60] sm:$0xff] %v155
  %184 = vst [vmem:[%s2 + $0x68] sm:$0xff] %v157
  %185 = vst [vmem:[%s2 + $0x70] sm:$0xff] %v161
  %186 = vst [vmem:[%s2 + $0x78] sm:$0xff] %v163
  %187 = vst [vmem:[%s2 + $0x80] sm:$0xff] %v167
  %188 = vst [vmem:[%s2 + $0x88] sm:$0xff] %v169
  // Predicated region
  $region10: #{apply_pitch_shift.4} parent=0 // pred_check
    _
  $region11: #{apply_pitch_shift.4} parent=0 // pred_check_branch
    %190 = sbr.rel (0) target = $region13
  $region12: #{apply_pitch_shift.4} parent=0 // pred_region
    _
  $region13: #{apply_pitch_shift.4} parent=0 // pred_fallthru
    _
  // Predicated region
  $region14: #{apply_pitch_shift.4} parent=0 // pred_check
    _
  $region15: #{apply_pitch_shift.4} parent=0 // pred_check_branch
    %192 = sbr.rel (0) target = $region17
  $region16: #{apply_pitch_shift.4} parent=0 // pred_region
    _
  $region17: #{apply_pitch_shift.4} parent=0 // pred_fallthru
    _

// kernel: apply_pitch_shift.5
$region0: #{apply_pitch_shift.5}
  #allocation0 [shape = 'u32[]', space=smem, size = 0x4, offset = 0x4, fixed_abs, tag = 'smem constant byte address 0x4 - core index']
  #allocation1 [shape = 'u32[144,128]{1,0:T(1,128)}', space=vmem, size = 0x12000, scoped, tag = 'internal scratch']
  %s0 = inlined_call_operand.vmem [shape: f32[136,256], index: 0, kind: input, shape index: {}]
  %s1 = inlined_call_operand.vmem [shape: f32[136,256], index: 1, kind: input, shape index: {}]
  %s2 = inlined_call_operand.vmem [shape: f32[136,1], index: 2, kind: input, shape index: {}]
  %s3 = inlined_call_operand.vmem [shape: f32[136,384], index: 3, kind: output, shape index: {}]
  %s4 = sld [smem:[#allocation0]]
  $region22: #{apply_pitch_shift.5} parent=0
    _
  %s6 = ssub.s32 1, %s4
  %s7 = scalar_select 0, %s6, %s4
  // Predicated region
  $region2: #{apply_pitch_shift.5} parent=0 // pred_check
    _
  $region3: #{apply_pitch_shift.5} parent=0 // pred_check_branch
    %9 = sbr.rel (0) target = $region5
  $region4: #{apply_pitch_shift.5} parent=0 // pred_region
    _
  $region5: #{apply_pitch_shift.5} parent=0 // pred_fallthru
    _
  // Predicated region
  $region6: #{apply_pitch_shift.5} parent=0 // pred_check
    _
  $region7: #{apply_pitch_shift.5} parent=0 // pred_check_branch
    %11 = sbr.rel (0) target = $region9
  $region8: #{apply_pitch_shift.5} parent=0 // pred_region
    _
  $region9: #{apply_pitch_shift.5} parent=0 // pred_fallthru
    _
  // Predicated region
  $region10: #{apply_pitch_shift.5} parent=0 // pred_check
    _
  $region11: #{apply_pitch_shift.5} parent=0 // pred_check_branch
    %13 = sbr.rel (0) target = $region13
  $region12: #{apply_pitch_shift.5} parent=0 // pred_region
    _
  $region13: #{apply_pitch_shift.5} parent=0 // pred_fallthru
    _
  %v14 = vld [vmem:[%s0] sm:$0xff]
  %v15 = vld [vmem:[%s0 + $0x8] sm:$0xff]
  %v16 = vld [vmem:[%s0 + $0x10] sm:$0xff]
  %v17 = vld [vmem:[%s0 + $0x18] sm:$0xff]
  %v18 = vld [vmem:[%s0 + $0x20] sm:$0xff]
  %v19 = vld [vmem:[%s0 + $0x28] sm:$0xff]
  %v20 = vld [vmem:[%s0 + $0x30] sm:$0xff]
  %v21 = vld [vmem:[%s0 + $0x38] sm:$0xff]
  %v22 = vld [vmem:[%s0 + $0x40] sm:$0xff]
  %v23 = vld [vmem:[%s0 + $0x48] sm:$0xff]
  %v24 = vld [vmem:[%s0 + $0x50] sm:$0xff]
  %v25 = vld [vmem:[%s0 + $0x58] sm:$0xff]
  %v26 = vld [vmem:[%s0 + $0x60] sm:$0xff]
  %v27 = vld [vmem:[%s0 + $0x68] sm:$0xff]
  %v28 = vld [vmem:[%s0 + $0x70] sm:$0xff]
  %v29 = vld [vmem:[%s0 + $0x78] sm:$0xff]
  %v30 = vld [vmem:[%s0 + $0x80] sm:$0xff]
  %v31 = vld [vmem:[%s0 + $0x88] sm:$0xff]
  %v32 = vld [vmem:[%s0 + $0x90] sm:$0xff]
  %v33 = vld [vmem:[%s0 + $0x98] sm:$0xff]
  %v34 = vld [vmem:[%s0 + $0xa0] sm:$0xff]
  %v35 = vld [vmem:[%s0 + $0xa8] sm:$0xff]
  %v36 = vld [vmem:[%s0 + $0xb0] sm:$0xff]
  %v37 = vld [vmem:[%s0 + $0xb8] sm:$0xff]
  %v38 = vld [vmem:[%s0 + $0xc0] sm:$0xff]
  %v39 = vld [vmem:[%s0 + $0xc8] sm:$0xff]
  %v40 = vld [vmem:[%s0 + $0xd0] sm:$0xff]
  %v41 = vld [vmem:[%s0 + $0xd8] sm:$0xff]
  %v42 = vld [vmem:[%s0 + $0xe0] sm:$0xff]
  %v43 = vld [vmem:[%s0 + $0xe8] sm:$0xff]
  %v44 = vld [vmem:[%s0 + $0xf0] sm:$0xff]
  %v45 = vld [vmem:[%s0 + $0xf8] sm:$0xff]
  %v46 = vld [vmem:[%s0 + $0x100] sm:$0xff]
  %v47 = vld [vmem:[%s0 + $0x108] sm:$0xff]
  %v48 = vld [vmem:[%s1] sm:$0xff]
  %v49 = vld [vmem:[%s1 + $0x8] sm:$0xff]
  %v50 = vld [vmem:[%s1 + $0x10] sm:$0xff]
  %v51 = vld [vmem:[%s1 + $0x18] sm:$0xff]
  %v52 = vld [vmem:[%s1 + $0x20] sm:$0xff]
  %v53 = vld [vmem:[%s1 + $0x28] sm:$0xff]
  %v54 = vld [vmem:[%s1 + $0x30] sm:$0xff]
  %v55 = vld [vmem:[%s1 + $0x38] sm:$0xff]
  %v56 = vld [vmem:[%s1 + $0x40] sm:$0xff]
  %v57 = vld [vmem:[%s1 + $0x48] sm:$0xff]
  %v58 = vld [vmem:[%s1 + $0x50] sm:$0xff]
  %v59 = vld [vmem:[%s1 + $0x58] sm:$0xff]
  %v60 = vld [vmem:[%s1 + $0x60] sm:$0xff]
  %v61 = vld [vmem:[%s1 + $0x68] sm:$0xff]
  %v62 = vld [vmem:[%s1 + $0x70] sm:$0xff]
  %v63 = vld [vmem:[%s1 + $0x78] sm:$0xff]
  %v64 = vld [vmem:[%s1 + $0x80] sm:$0xff]
  %v65 = vld [vmem:[%s1 + $0x88] sm:$0xff]
  %v66 = vld [vmem:[%s1 + $0x90] sm:$0xff]
  %v67 = vld [vmem:[%s1 + $0x98] sm:$0xff]
  %v68 = vld [vmem:[%s1 + $0xa0] sm:$0xff]
  %v69 = vld [vmem:[%s1 + $0xa8] sm:$0xff]
  %v70 = vld [vmem:[%s1 + $0xb0] sm:$0xff]
  %v71 = vld [vmem:[%s1 + $0xb8] sm:$0xff]
  %v72 = vld [vmem:[%s1 + $0xc0] sm:$0xff]
  %v73 = vld [vmem:[%s1 + $0xc8] sm:$0xff]
  %v74 = vld [vmem:[%s1 + $0xd0] sm:$0xff]
  %v75 = vld [vmem:[%s1 + $0xd8] sm:$0xff]
  %v76 = vld [vmem:[%s1 + $0xe0] sm:$0xff]
  %v77 = vld [vmem:[%s1 + $0xe8] sm:$0xff]
  %v78 = vld [vmem:[%s1 + $0xf0] sm:$0xff]
  %v79 = vld [vmem:[%s1 + $0xf8] sm:$0xff]
  %v80 = vld [vmem:[%s1 + $0x100] sm:$0xff]
  %v81 = vld [vmem:[%s1 + $0x108] sm:$0xff]
  %v82 = vmul.f32 %v14, %v14
  %v83 = vmul.f32 %v16, %v16
  %v84 = vmul.f32 %v18, %v18
  %v85 = vmul.f32 %v20, %v20
  %v86 = vmul.f32 %v22, %v22
  %v87 = vmul.f32 %v24, %v24
  %v88 = vmul.f32 %v26, %v26
  %v89 = vmul.f32 %v28, %v28
  %v90 = vmul.f32 %v30, %v30
  %v91 = vmul.f32 %v32, %v32
  %v92 = vmul.f32 %v34, %v34
  %v93 = vmul.f32 %v36, %v36
  %v94 = vmul.f32 %v38, %v38
  %v95 = vmul.f32 %v40, %v40
  %v96 = vmul.f32 %v42, %v42
  %v97 = vmul.f32 %v44, %v44
  %v98 = vmul.f32 %v46, %v46
  %v99 = vmul.f32 %v15, %v15
  %v100 = vmul.f32 %v17, %v17
  %v101 = vmul.f32 %v19, %v19
  %v102 = vmul.f32 %v21, %v21
  %v103 = vmul.f32 %v23, %v23
  %v104 = vmul.f32 %v25, %v25
  %v105 = vmul.f32 %v27, %v27
  %v106 = vmul.f32 %v29, %v29
  %v107 = vmul.f32 %v31, %v31
  %v108 = vmul.f32 %v33, %v33
  %v109 = vmul.f32 %v35, %v35
  %v110 = vmul.f32 %v37, %v37
  %v111 = vmul.f32 %v39, %v39
  %v112 = vmul.f32 %v41, %v41
  %v113 = vmul.f32 %v43, %v43
  %v114 = vmul.f32 %v45, %v45
  %v115 = vmul.f32 %v47, %v47
  %v116 = vadd.f32 %v82, %v99
  %v117 = vadd.f32 %v83, %v100
  %v118 = vadd.f32 %v84, %v101
  %v119 = vadd.f32 %v85, %v102
  %v120 = vadd.f32 %v86, %v103
  %v121 = vadd.f32 %v87, %v104
  %v122 = vadd.f32 %v88, %v105
  %v123 = vadd.f32 %v89, %v106
  %v124 = vadd.f32 %v90, %v107
  %v125 = vadd.f32 %v91, %v108
  %v126 = vadd.f32 %v92, %v109
  %v127 = vadd.f32 %v93, %v110
  %v128 = vadd.f32 %v94, %v111
  %v129 = vadd.f32 %v95, %v112
  %v130 = vadd.f32 %v96, %v113
  %v131 = vadd.f32 %v97, %v114
  %v132 = vadd.f32 %v98, %v115
  %v133 = vrsqrt.pop %v116
  %v134 = vmul.f32 %v116, %v133
  %vm135 = vcmp.eq.f32.partialorder %v116, inf
  %v136 = vsel %vm135, %v116, %v134
  %vm137 = vcmp.eq.f32.partialorder %v116, 0.0
  %v138 = vand.u32 %v116, 2147483648
  %v139 = vsel %vm137, %v138, %v136
  %v140 = vrsqrt.pop %v117
  %v141 = vmul.f32 %v117, %v140
  %vm142 = vcmp.eq.f32.partialorder %v117, inf
  %v143 = vsel %vm142, %v117, %v141
  %vm144 = vcmp.eq.f32.partialorder %v117, 0.0
  %v145 = vand.u32 %v117, 2147483648
  %v146 = vsel %vm144, %v145, %v143
  %v147 = vrsqrt.pop %v118
  %v148 = vmul.f32 %v118, %v147
  %vm149 = vcmp.eq.f32.partialorder %v118, inf
  %v150 = vsel %vm149, %v118, %v148
  %vm151 = vcmp.eq.f32.partialorder %v118, 0.0
  %v152 = vand.u32 %v118, 2147483648
  %v153 = vsel %vm151, %v152, %v150
  %v154 = vrsqrt.pop %v119
  %v155 = vmul.f32 %v119, %v154
  %vm156 = vcmp.eq.f32.partialorder %v119, inf
  %v157 = vsel %vm156, %v119, %v155
  %vm158 = vcmp.eq.f32.partialorder %v119, 0.0
  %v159 = vand.u32 %v119, 2147483648
  %v160 = vsel %vm158, %v159, %v157
  %v161 = vrsqrt.pop %v120
  %v162 = vmul.f32 %v120, %v161
  %vm163 = vcmp.eq.f32.partialorder %v120, inf
  %v164 = vsel %vm163, %v120, %v162
  %vm165 = vcmp.eq.f32.partialorder %v120, 0.0
  %v166 = vand.u32 %v120, 2147483648
  %v167 = vsel %vm165, %v166, %v164
  %v168 = vrsqrt.pop %v121
  %v169 = vmul.f32 %v121, %v168
  %vm170 = vcmp.eq.f32.partialorder %v121, inf
  %v171 = vsel %vm170, %v121, %v169
  %vm172 = vcmp.eq.f32.partialorder %v121, 0.0
  %v173 = vand.u32 %v121, 2147483648
  %v174 = vsel %vm172, %v173, %v171
  %v175 = vrsqrt.pop %v122
  %v176 = vmul.f32 %v122, %v175
  %vm177 = vcmp.eq.f32.partialorder %v122, inf
  %v178 = vsel %vm177, %v122, %v176
  %vm179 = vcmp.eq.f32.partialorder %v122, 0.0
  %v180 = vand.u32 %v122, 2147483648
  %v181 = vsel %vm179, %v180, %v178
  %v182 = vrsqrt.pop %v123
  %v183 = vmul.f32 %v123, %v182
  %vm184 = vcmp.eq.f32.partialorder %v123, inf
  %v185 = vsel %vm184, %v123, %v183
  %vm186 = vcmp.eq.f32.partialorder %v123, 0.0
  %v187 = vand.u32 %v123, 2147483648
  %v188 = vsel %vm186, %v187, %v185
  %v189 = vrsqrt.pop %v124
  %v190 = vmul.f32 %v124, %v189
  %vm191 = vcmp.eq.f32.partialorder %v124, inf
  %v192 = vsel %vm191, %v124, %v190
  %vm193 = vcmp.eq.f32.partialorder %v124, 0.0
  %v194 = vand.u32 %v124, 2147483648
  %v195 = vsel %vm193, %v194, %v192
  %v196 = vrsqrt.pop %v125
  %v197 = vmul.f32 %v125, %v196
  %vm198 = vcmp.eq.f32.partialorder %v125, inf
  %v199 = vsel %vm198, %v125, %v197
  %vm200 = vcmp.eq.f32.partialorder %v125, 0.0
  %v201 = vand.u32 %v125, 2147483648
  %v202 = vsel %vm200, %v201, %v199
  %v203 = vrsqrt.pop %v126
  %v204 = vmul.f32 %v126, %v203
  %vm205 = vcmp.eq.f32.partialorder %v126, inf
  %v206 = vsel %vm205, %v126, %v204
  %vm207 = vcmp.eq.f32.partialorder %v126, 0.0
  %v208 = vand.u32 %v126, 2147483648
  %v209 = vsel %vm207, %v208, %v206
  %v210 = vrsqrt.pop %v127
  %v211 = vmul.f32 %v127, %v210
  %vm212 = vcmp.eq.f32.partialorder %v127, inf
  %v213 = vsel %vm212, %v127, %v211
  %vm214 = vcmp.eq.f32.partialorder %v127, 0.0
  %v215 = vand.u32 %v127, 2147483648
  %v216 = vsel %vm214, %v215, %v213
  %v217 = vrsqrt.pop %v128
  %v218 = vmul.f32 %v128, %v217
  %vm219 = vcmp.eq.f32.partialorder %v128, inf
  %v220 = vsel %vm219, %v128, %v218
  %vm221 = vcmp.eq.f32.partialorder %v128, 0.0
  %v222 = vand.u32 %v128, 2147483648
  %v223 = vsel %vm221, %v222, %v220
  %v224 = vrsqrt.pop %v129
  %v225 = vmul.f32 %v129, %v224
  %vm226 = vcmp.eq.f32.partialorder %v129, inf
  %v227 = vsel %vm226, %v129, %v225
  %vm228 = vcmp.eq.f32.partialorder %v129, 0.0
  %v229 = vand.u32 %v129, 2147483648
  %v230 = vsel %vm228, %v229, %v227
  %v231 = vrsqrt.pop %v130
  %v232 = vmul.f32 %v130, %v231
  %vm233 = vcmp.eq.f32.partialorder %v130, inf
  %v234 = vsel %vm233, %v130, %v232
  %vm235 = vcmp.eq.f32.partialorder %v130, 0.0
  %v236 = vand.u32 %v130, 2147483648
  %v237 = vsel %vm235, %v236, %v234
  %v238 = vrsqrt.pop %v131
  %v239 = vmul.f32 %v131, %v238
  %vm240 = vcmp.eq.f32.partialorder %v131, inf
  %v241 = vsel %vm240, %v131, %v239
  %vm242 = vcmp.eq.f32.partialorder %v131, 0.0
  %v243 = vand.u32 %v131, 2147483648
  %v244 = vsel %vm242, %v243, %v241
  %v245 = vrsqrt.pop %v132
  %v246 = vmul.f32 %v132, %v245
  %vm247 = vcmp.eq.f32.partialorder %v132, inf
  %v248 = vsel %vm247, %v132, %v246
  %vm249 = vcmp.eq.f32.partialorder %v132, 0.0
  %v250 = vand.u32 %v132, 2147483648
  %v251 = vsel %vm249, %v250, %v248
  %v252 = vmul.f32 %v48, %v48
  %v253 = vmul.f32 %v50, %v50
  %v254 = vmul.f32 %v52, %v52
  %v255 = vmul.f32 %v54, %v54
  %v256 = vmul.f32 %v56, %v56
  %v257 = vmul.f32 %v58, %v58
  %v258 = vmul.f32 %v60, %v60
  %v259 = vmul.f32 %v62, %v62
  %v260 = vmul.f32 %v64, %v64
  %v261 = vmul.f32 %v66, %v66
  %v262 = vmul.f32 %v68, %v68
  %v263 = vmul.f32 %v70, %v70
  %v264 = vmul.f32 %v72, %v72
  %v265 = vmul.f32 %v74, %v74
  %v266 = vmul.f32 %v76, %v76
  %v267 = vmul.f32 %v78, %v78
  %v268 = vmul.f32 %v80, %v80
  %v269 = vmul.f32 %v49, %v49
  %v270 = vmul.f32 %v51, %v51
  %v271 = vmul.f32 %v53, %v53
  %v272 = vmul.f32 %v55, %v55
  %v273 = vmul.f32 %v57, %v57
  %v274 = vmul.f32 %v59, %v59
  %v275 = vmul.f32 %v61, %v61
  %v276 = vmul.f32 %v63, %v63
  %v277 = vmul.f32 %v65, %v65
  %v278 = vmul.f32 %v67, %v67
  %v279 = vmul.f32 %v69, %v69
  %v280 = vmul.f32 %v71, %v71
  %v281 = vmul.f32 %v73, %v73
  %v282 = vmul.f32 %v75, %v75
  %v283 = vmul.f32 %v77, %v77
  %v284 = vmul.f32 %v79, %v79
  %v285 = vmul.f32 %v81, %v81
  %v286 = vadd.f32 %v252, %v269
  %v287 = vadd.f32 %v253, %v270
  %v288 = vadd.f32 %v254, %v271
  %v289 = vadd.f32 %v255, %v272
  %v290 = vadd.f32 %v256, %v273
  %v291 = vadd.f32 %v257, %v274
  %v292 = vadd.f32 %v258, %v275
  %v293 = vadd.f32 %v259, %v276
  %v294 = vadd.f32 %v260, %v277
  %v295 = vadd.f32 %v261, %v278
  %v296 = vadd.f32 %v262, %v279
  %v297 = vadd.f32 %v263, %v280
  %v298 = vadd.f32 %v264, %v281
  %v299 = vadd.f32 %v265, %v282
  %v300 = vadd.f32 %v266, %v283
  %v301 = vadd.f32 %v267, %v284
  %v302 = vadd.f32 %v268, %v285
  %v303 = vrsqrt.pop %v286
  %v304 = vmul.f32 %v286, %v303
  %vm305 = vcmp.eq.f32.partialorder %v286, inf
  %v306 = vsel %vm305, %v286, %v304
  %vm307 = vcmp.eq.f32.partialorder %v286, 0.0
  %v308 = vand.u32 %v286, 2147483648
  %v309 = vsel %vm307, %v308, %v306
  %v310 = vrsqrt.pop %v287
  %v311 = vmul.f32 %v287, %v310
  %vm312 = vcmp.eq.f32.partialorder %v287, inf
  %v313 = vsel %vm312, %v287, %v311
  %vm314 = vcmp.eq.f32.partialorder %v287, 0.0
  %v315 = vand.u32 %v287, 2147483648
  %v316 = vsel %vm314, %v315, %v313
  %v317 = vrsqrt.pop %v288
  %v318 = vmul.f32 %v288, %v317
  %vm319 = vcmp.eq.f32.partialorder %v288, inf
  %v320 = vsel %vm319, %v288, %v318
  %vm321 = vcmp.eq.f32.partialorder %v288, 0.0
  %v322 = vand.u32 %v288, 2147483648
  %v323 = vsel %vm321, %v322, %v320
  %v324 = vrsqrt.pop %v289
  %v325 = vmul.f32 %v289, %v324
  %vm326 = vcmp.eq.f32.partialorder %v289, inf
  %v327 = vsel %vm326, %v289, %v325
  %vm328 = vcmp.eq.f32.partialorder %v289, 0.0
  %v329 = vand.u32 %v289, 2147483648
  %v330 = vsel %vm328, %v329, %v327
  %v331 = vrsqrt.pop %v290
  %v332 = vmul.f32 %v290, %v331
  %vm333 = vcmp.eq.f32.partialorder %v290, inf
  %v334 = vsel %vm333, %v290, %v332
  %vm335 = vcmp.eq.f32.partialorder %v290, 0.0
  %v336 = vand.u32 %v290, 2147483648
  %v337 = vsel %vm335, %v336, %v334
  %v338 = vrsqrt.pop %v291
  %v339 = vmul.f32 %v291, %v338
  %vm340 = vcmp.eq.f32.partialorder %v291, inf
  %v341 = vsel %vm340, %v291, %v339
  %vm342 = vcmp.eq.f32.partialorder %v291, 0.0
  %v343 = vand.u32 %v291, 2147483648
  %v344 = vsel %vm342, %v343, %v341
  %v345 = vrsqrt.pop %v292
  %v346 = vmul.f32 %v292, %v345
  %vm347 = vcmp.eq.f32.partialorder %v292, inf
  %v348 = vsel %vm347, %v292, %v346
  %vm349 = vcmp.eq.f32.partialorder %v292, 0.0
  %v350 = vand.u32 %v292, 2147483648
  %v351 = vsel %vm349, %v350, %v348
  %v352 = vrsqrt.pop %v293
  %v353 = vmul.f32 %v293, %v352
  %vm354 = vcmp.eq.f32.partialorder %v293, inf
  %v355 = vsel %vm354, %v293, %v353
  %vm356 = vcmp.eq.f32.partialorder %v293, 0.0
  %v357 = vand.u32 %v293, 2147483648
  %v358 = vsel %vm356, %v357, %v355
  %v359 = vrsqrt.pop %v294
  %v360 = vmul.f32 %v294, %v359
  %vm361 = vcmp.eq.f32.partialorder %v294, inf
  %v362 = vsel %vm361, %v294, %v360
  %vm363 = vcmp.eq.f32.partialorder %v294, 0.0
  %v364 = vand.u32 %v294, 2147483648
  %v365 = vsel %vm363, %v364, %v362
  %v366 = vrsqrt.pop %v295
  %v367 = vmul.f32 %v295, %v366
  %vm368 = vcmp.eq.f32.partialorder %v295, inf
  %v369 = vsel %vm368, %v295, %v367
  %vm370 = vcmp.eq.f32.partialorder %v295, 0.0
  %v371 = vand.u32 %v295, 2147483648
  %v372 = vsel %vm370, %v371, %v369
  %v373 = vrsqrt.pop %v296
  %v374 = vmul.f32 %v296, %v373
  %vm375 = vcmp.eq.f32.partialorder %v296, inf
  %v376 = vsel %vm375, %v296, %v374
  %vm377 = vcmp.eq.f32.partialorder %v296, 0.0
  %v378 = vand.u32 %v296, 2147483648
  %v379 = vsel %vm377, %v378, %v376
  %v380 = vrsqrt.pop %v297
  %v381 = vmul.f32 %v297, %v380
  %vm382 = vcmp.eq.f32.partialorder %v297, inf
  %v383 = vsel %vm382, %v297, %v381
  %vm384 = vcmp.eq.f32.partialorder %v297, 0.0
  %v385 = vand.u32 %v297, 2147483648
  %v386 = vsel %vm384, %v385, %v383
  %v387 = vrsqrt.pop %v298
  %v388 = vmul.f32 %v298, %v387
  %vm389 = vcmp.eq.f32.partialorder %v298, inf
  %v390 = vsel %vm389, %v298, %v388
  %vm391 = vcmp.eq.f32.partialorder %v298, 0.0
  %v392 = vand.u32 %v298, 2147483648
  %v393 = vsel %vm391, %v392, %v390
  %v394 = vrsqrt.pop %v299
  %v395 = vmul.f32 %v299, %v394
  %vm396 = vcmp.eq.f32.partialorder %v299, inf
  %v397 = vsel %vm396, %v299, %v395
  %vm398 = vcmp.eq.f32.partialorder %v299, 0.0
  %v399 = vand.u32 %v299, 2147483648
  %v400 = vsel %vm398, %v399, %v397
  %v401 = vrsqrt.pop %v300
  %v402 = vmul.f32 %v300, %v401
  %vm403 = vcmp.eq.f32.partialorder %v300, inf
  %v404 = vsel %vm403, %v300, %v402
  %vm405 = vcmp.eq.f32.partialorder %v300, 0.0
  %v406 = vand.u32 %v300, 2147483648
  %v407 = vsel %vm405, %v406, %v404
  %v408 = vrsqrt.pop %v301
  %v409 = vmul.f32 %v301, %v408
  %vm410 = vcmp.eq.f32.partialorder %v301, inf
  %v411 = vsel %vm410, %v301, %v409
  %vm412 = vcmp.eq.f32.partialorder %v301, 0.0
  %v413 = vand.u32 %v301, 2147483648
  %v414 = vsel %vm412, %v413, %v411
  %v415 = vrsqrt.pop %v302
  %v416 = vmul.f32 %v302, %v415
  %vm417 = vcmp.eq.f32.partialorder %v302, inf
  %v418 = vsel %vm417, %v302, %v416
  %vm419 = vcmp.eq.f32.partialorder %v302, 0.0
  %v420 = vand.u32 %v302, 2147483648
  %v421 = vsel %vm419, %v420, %v418
  %v422 = vld [vmem:[%s2] sm:$0xff]
  %v423 = vld [vmem:[%s2 + $0x8] sm:$0xff]
  %v424 = vld [vmem:[%s2 + $0x10] sm:$0xff]
  %v425 = vld [vmem:[%s2 + $0x18] sm:$0xff]
  %v426 = vld [vmem:[%s2 + $0x20] sm:$0xff]
  %v427 = vld [vmem:[%s2 + $0x28] sm:$0xff]
  %v428 = vld [vmem:[%s2 + $0x30] sm:$0xff]
  %v429 = vld [vmem:[%s2 + $0x38] sm:$0xff]
  %v430 = vld [vmem:[%s2 + $0x40] sm:$0xff]
  %v431 = vld [vmem:[%s2 + $0x48] sm:$0xff]
  %v432 = vld [vmem:[%s2 + $0x50] sm:$0xff]
  %v433 = vld [vmem:[%s2 + $0x58] sm:$0xff]
  %v434 = vld [vmem:[%s2 + $0x60] sm:$0xff]
  %v435 = vld [vmem:[%s2 + $0x68] sm:$0xff]
  %v436 = vld [vmem:[%s2 + $0x70] sm:$0xff]
  %v437 = vld [vmem:[%s2 + $0x78] sm:$0xff]
  %v438 = vld [vmem:[%s2 + $0x80] sm:$0xff]
  %440 = vset.pattern.permute.xlu0 0
  %441 = vperm.xlu0 %440, %v422
  %v442 = vpop.permute.xlu0 %441
  %445 = vset.pattern.permute.xlu0 0
  %446 = vperm.xlu0 %445, %v423
  %v447 = vpop.permute.xlu0 %446
  %450 = vset.pattern.permute.xlu0 0
  %451 = vperm.xlu0 %450, %v424
  %v452 = vpop.permute.xlu0 %451
  %455 = vset.pattern.permute.xlu0 0
  %456 = vperm.xlu0 %455, %v425
  %v457 = vpop.permute.xlu0 %456
  %460 = vset.pattern.permute.xlu0 0
  %461 = vperm.xlu0 %460, %v426
  %v462 = vpop.permute.xlu0 %461
  %465 = vset.pattern.permute.xlu0 0
  %466 = vperm.xlu0 %465, %v427
  %v467 = vpop.permute.xlu0 %466
  %470 = vset.pattern.permute.xlu0 0
  %471 = vperm.xlu0 %470, %v428
  %v472 = vpop.permute.xlu0 %471
  %475 = vset.pattern.permute.xlu0 0
  %476 = vperm.xlu0 %475, %v429
  %v477 = vpop.permute.xlu0 %476
  %480 = vset.pattern.permute.xlu0 0
  %481 = vperm.xlu0 %480, %v430
  %v482 = vpop.permute.xlu0 %481
  %485 = vset.pattern.permute.xlu0 0
  %486 = vperm.xlu0 %485, %v431
  %v487 = vpop.permute.xlu0 %486
  %490 = vset.pattern.permute.xlu0 0
  %491 = vperm.xlu0 %490, %v432
  %v492 = vpop.permute.xlu0 %491
  %495 = vset.pattern.permute.xlu0 0
  %496 = vperm.xlu0 %495, %v433
  %v497 = vpop.permute.xlu0 %496
  %500 = vset.pattern.permute.xlu0 0
  %501 = vperm.xlu0 %500, %v434
  %v502 = vpop.permute.xlu0 %501
  %505 = vset.pattern.permute.xlu0 0
  %506 = vperm.xlu0 %505, %v435
  %v507 = vpop.permute.xlu0 %506
  %510 = vset.pattern.permute.xlu0 0
  %511 = vperm.xlu0 %510, %v436
  %v512 = vpop.permute.xlu0 %511
  %515 = vset.pattern.permute.xlu0 0
  %516 = vperm.xlu0 %515, %v437
  %v517 = vpop.permute.xlu0 %516
  %520 = vset.pattern.permute.xlu0 0
  %521 = vperm.xlu0 %520, %v438
  %v522 = vpop.permute.xlu0 %521
  %v524 = vmul.f32 %v442, %v309
  %v525 = vmul.f32 %v447, %v316
  %v526 = vmul.f32 %v452, %v323
  %v527 = vmul.f32 %v457, %v330
  %v528 = vmul.f32 %v462, %v337
  %v529 = vmul.f32 %v467, %v344
  %v530 = vmul.f32 %v472, %v351
  %v531 = vmul.f32 %v477, %v358
  %v532 = vmul.f32 %v482, %v365
  %v533 = vmul.f32 %v487, %v372
  %v534 = vmul.f32 %v492, %v379
  %v535 = vmul.f32 %v497, %v386
  %v536 = vmul.f32 %v502, %v393
  %v537 = vmul.f32 %v507, %v400
  %v538 = vmul.f32 %v512, %v407
  %v539 = vmul.f32 %v517, %v414
  %v540 = vmul.f32 %v522, %v421
  %v541 = vsub.f32 1.0, %v422
  %v542 = vsub.f32 1.0, %v423
  %v543 = vsub.f32 1.0, %v424
  %v544 = vsub.f32 1.0, %v425
  %v545 = vsub.f32 1.0, %v426
  %v546 = vsub.f32 1.0, %v427
  %v547 = vsub.f32 1.0, %v428
  %v548 = vsub.f32 1.0, %v429
  %v549 = vsub.f32 1.0, %v430
  %v550 = vsub.f32 1.0, %v431
  %v551 = vsub.f32 1.0, %v432
  %v552 = vsub.f32 1.0, %v433
  %v553 = vsub.f32 1.0, %v434
  %v554 = vsub.f32 1.0, %v435
  %v555 = vsub.f32 1.0, %v436
  %v556 = vsub.f32 1.0, %v437
  %v557 = vsub.f32 1.0, %v438
  %559 = vset.pattern.permute.xlu0 0
  %560 = vperm.xlu0 %559, %v541
  %v561 = vpop.permute.xlu0 %560
  %564 = vset.pattern.permute.xlu0 0
  %565 = vperm.xlu0 %564, %v542
  %v566 = vpop.permute.xlu0 %565
  %569 = vset.pattern.permute.xlu0 0
  %570 = vperm.xlu0 %569, %v543
  %v571 = vpop.permute.xlu0 %570
  %574 = vset.pattern.permute.xlu0 0
  %575 = vperm.xlu0 %574, %v544
  %v576 = vpop.permute.xlu0 %575
  %579 = vset.pattern.permute.xlu0 0
  %580 = vperm.xlu0 %579, %v545
  %v581 = vpop.permute.xlu0 %580
  %584 = vset.pattern.permute.xlu0 0
  %585 = vperm.xlu0 %584, %v546
  %v586 = vpop.permute.xlu0 %585
  %589 = vset.pattern.permute.xlu0 0
  %590 = vperm.xlu0 %589, %v547
  %v591 = vpop.permute.xlu0 %590
  %594 = vset.pattern.permute.xlu0 0
  %595 = vperm.xlu0 %594, %v548
  %v596 = vpop.permute.xlu0 %595
  %599 = vset.pattern.permute.xlu0 0
  %600 = vperm.xlu0 %599, %v549
  %v601 = vpop.permute.xlu0 %600
  %604 = vset.pattern.permute.xlu0 0
  %605 = vperm.xlu0 %604, %v550
  %v606 = vpop.permute.xlu0 %605
  %609 = vset.pattern.permute.xlu0 0
  %610 = vperm.xlu0 %609, %v551
  %v611 = vpop.permute.xlu0 %610
  %614 = vset.pattern.permute.xlu0 0
  %615 = vperm.xlu0 %614, %v552
  %v616 = vpop.permute.xlu0 %615
  %619 = vset.pattern.permute.xlu0 0
  %620 = vperm.xlu0 %619, %v553
  %v621 = vpop.permute.xlu0 %620
  %624 = vset.pattern.permute.xlu0 0
  %625 = vperm.xlu0 %624, %v554
  %v626 = vpop.permute.xlu0 %625
  %629 = vset.pattern.permute.xlu0 0
  %630 = vperm.xlu0 %629, %v555
  %v631 = vpop.permute.xlu0 %630
  %634 = vset.pattern.permute.xlu0 0
  %635 = vperm.xlu0 %634, %v556
  %v636 = vpop.permute.xlu0 %635
  %639 = vset.pattern.permute.xlu0 0
  %640 = vperm.xlu0 %639, %v557
  %v641 = vpop.permute.xlu0 %640
  %v643 = vmul.f32 %v561, %v139
  %v644 = vmul.f32 %v566, %v146
  %v645 = vmul.f32 %v571, %v153
  %v646 = vmul.f32 %v576, %v160
  %v647 = vmul.f32 %v581, %v167
  %v648 = vmul.f32 %v586, %v174
  %v649 = vmul.f32 %v591, %v181
  %v650 = vmul.f32 %v596, %v188
  %v651 = vmul.f32 %v601, %v195
  %v652 = vmul.f32 %v606, %v202
  %v653 = vmul.f32 %v611, %v209
  %v654 = vmul.f32 %v616, %v216
  %v655 = vmul.f32 %v621, %v223
  %v656 = vmul.f32 %v626, %v230
  %v657 = vmul.f32 %v631, %v237
  %v658 = vmul.f32 %v636, %v244
  %v659 = vmul.f32 %v641, %v251
  %v660 = vadd.f32 %v524, %v643
  %v661 = vadd.f32 %v525, %v644
  %v662 = vadd.f32 %v526, %v645
  %v663 = vadd.f32 %v527, %v646
  %v664 = vadd.f32 %v528, %v647
  %v665 = vadd.f32 %v529, %v648
  %v666 = vadd.f32 %v530, %v649
  %v667 = vadd.f32 %v531, %v650
  %v668 = vadd.f32 %v532, %v651
  %v669 = vadd.f32 %v533, %v652
  %v670 = vadd.f32 %v534, %v653
  %v671 = vadd.f32 %v535, %v654
  %v672 = vadd.f32 %v536, %v655
  %v673 = vadd.f32 %v537, %v656
  %v674 = vadd.f32 %v538, %v657
  %v675 = vadd.f32 %v539, %v658
  %v676 = vadd.f32 %v540, %v659
  %v677 = vmul.f32 %v48, %v14
  %v678 = vmul.f32 %v50, %v16
  %v679 = vmul.f32 %v52, %v18
  %v680 = vmul.f32 %v54, %v20
  %v681 = vmul.f32 %v56, %v22
  %v682 = vmul.f32 %v58, %v24
  %v683 = vmul.f32 %v60, %v26
  %v684 = vmul.f32 %v62, %v28
  %v685 = vmul.f32 %v64, %v30
  %v686 = vmul.f32 %v66, %v32
  %v687 = vmul.f32 %v68, %v34
  %v688 = vmul.f32 %v70, %v36
  %v689 = vmul.f32 %v72, %v38
  %v690 = vmul.f32 %v74, %v40
  %v691 = vmul.f32 %v76, %v42
  %v692 = vmul.f32 %v78, %v44
  %v693 = vmul.f32 %v80, %v46
  %v694 = vmul.f32 %v49, %v15
  %v695 = vmul.f32 %v51, %v17
  %v696 = vmul.f32 %v53, %v19
  %v697 = vmul.f32 %v55, %v21
  %v698 = vmul.f32 %v57, %v23
  %v699 = vmul.f32 %v59, %v25
  %v700 = vmul.f32 %v61, %v27
  %v701 = vmul.f32 %v63, %v29
  %v702 = vmul.f32 %v65, %v31
  %v703 = vmul.f32 %v67, %v33
  %v704 = vmul.f32 %v69, %v35
  %v705 = vmul.f32 %v71, %v37
  %v706 = vmul.f32 %v73, %v39
  %v707 = vmul.f32 %v75, %v41
  %v708 = vmul.f32 %v77, %v43
  %v709 = vmul.f32 %v79, %v45
  %v710 = vmul.f32 %v81, %v47
  %v711 = vadd.f32 %v677, %v694
  %v712 = vadd.f32 %v678, %v695
  %v713 = vadd.f32 %v679, %v696
  %v714 = vadd.f32 %v680, %v697
  %v715 = vadd.f32 %v681, %v698
  %v716 = vadd.f32 %v682, %v699
  %v717 = vadd.f32 %v683, %v700
  %v718 = vadd.f32 %v684, %v701
  %v719 = vadd.f32 %v685, %v702
  %v720 = vadd.f32 %v686, %v703
  %v721 = vadd.f32 %v687, %v704
  %v722 = vadd.f32 %v688, %v705
  %v723 = vadd.f32 %v689, %v706
  %v724 = vadd.f32 %v690, %v707
  %v725 = vadd.f32 %v691, %v708
  %v726 = vadd.f32 %v692, %v709
  %v727 = vadd.f32 %v693, %v710
  %v728 = vmul.f32 %v49, %v14
  %v729 = vmul.f32 %v51, %v16
  %v730 = vmul.f32 %v53, %v18
  %v731 = vmul.f32 %v55, %v20
  %v732 = vmul.f32 %v57, %v22
  %v733 = vmul.f32 %v59, %v24
  %v734 = vmul.f32 %v61, %v26
  %v735 = vmul.f32 %v63, %v28
  %v736 = vmul.f32 %v65, %v30
  %v737 = vmul.f32 %v67, %v32
  %v738 = vmul.f32 %v69, %v34
  %v739 = vmul.f32 %v71, %v36
  %v740 = vmul.f32 %v73, %v38
  %v741 = vmul.f32 %v75, %v40
  %v742 = vmul.f32 %v77, %v42
  %v743 = vmul.f32 %v79, %v44
  %v744 = vmul.f32 %v81, %v46
  %v745 = vmul.f32 %v48, %v15
  %v746 = vmul.f32 %v50, %v17
  %v747 = vmul.f32 %v52, %v19
  %v748 = vmul.f32 %v54, %v21
  %v749 = vmul.f32 %v56, %v23
  %v750 = vmul.f32 %v58, %v25
  %v751 = vmul.f32 %v60, %v27
  %v752 = vmul.f32 %v62, %v29
  %v753 = vmul.f32 %v64, %v31
  %v754 = vmul.f32 %v66, %v33
  %v755 = vmul.f32 %v68, %v35
  %v756 = vmul.f32 %v70, %v37
  %v757 = vmul.f32 %v72, %v39
  %v758 = vmul.f32 %v74, %v41
  %v759 = vmul.f32 %v76, %v43
  %v760 = vmul.f32 %v78, %v45
  %v761 = vmul.f32 %v80, %v47
  %v762 = vsub.f32 %v728, %v745
  %v763 = vsub.f32 %v729, %v746
  %v764 = vsub.f32 %v730, %v747
  %v765 = vsub.f32 %v731, %v748
  %v766 = vsub.f32 %v732, %v749
  %v767 = vsub.f32 %v733, %v750
  %v768 = vsub.f32 %v734, %v751
  %v769 = vsub.f32 %v735, %v752
  %v770 = vsub.f32 %v736, %v753
  %v771 = vsub.f32 %v737, %v754
  %v772 = vsub.f32 %v738, %v755
  %v773 = vsub.f32 %v739, %v756
  %v774 = vsub.f32 %v740, %v757
  %v775 = vsub.f32 %v741, %v758
  %v776 = vsub.f32 %v742, %v759
  %v777 = vsub.f32 %v743, %v760
  %v778 = vsub.f32 %v744, %v761
  %v779 = vmul.f32 %v139, %v309
  %v780 = vmul.f32 %v146, %v316
  %v781 = vmul.f32 %v153, %v323
  %v782 = vmul.f32 %v160, %v330
  %v783 = vmul.f32 %v167, %v337
  %v784 = vmul.f32 %v174, %v344
  %v785 = vmul.f32 %v181, %v351
  %v786 = vmul.f32 %v188, %v358
  %v787 = vmul.f32 %v195, %v365
  %v788 = vmul.f32 %v202, %v372
  %v789 = vmul.f32 %v209, %v379
  %v790 = vmul.f32 %v216, %v386
  %v791 = vmul.f32 %v223, %v393
  %v792 = vmul.f32 %v230, %v400
  %v793 = vmul.f32 %v237, %v407
  %v794 = vmul.f32 %v244, %v414
  %v795 = vmul.f32 %v251, %v421
  %vm796 = vcmp.gt.f32.partialorder %v779, 0.0
  %vm797 = vcmp.gt.f32.partialorder %v780, 0.0
  %vm798 = vcmp.gt.f32.partialorder %v781, 0.0
  %vm799 = vcmp.gt.f32.partialorder %v782, 0.0
  %vm800 = vcmp.gt.f32.partialorder %v783, 0.0
  %vm801 = vcmp.gt.f32.partialorder %v784, 0.0
  %vm802 = vcmp.gt.f32.partialorder %v785, 0.0
  %vm803 = vcmp.gt.f32.partialorder %v786, 0.0
  %vm804 = vcmp.gt.f32.partialorder %v787, 0.0
  %vm805 = vcmp.gt.f32.partialorder %v788, 0.0
  %vm806 = vcmp.gt.f32.partialorder %v789, 0.0
  %vm807 = vcmp.gt.f32.partialorder %v790, 0.0
  %vm808 = vcmp.gt.f32.partialorder %v791, 0.0
  %vm809 = vcmp.gt.f32.partialorder %v792, 0.0
  %vm810 = vcmp.gt.f32.partialorder %v793, 0.0
  %vm811 = vcmp.gt.f32.partialorder %v794, 0.0
  %vm812 = vcmp.gt.f32.partialorder %v795, 0.0
  %v813 = vmax.f32 %v779, 1e-30
  %v814 = vmax.f32 %v780, 1e-30
  %v815 = vmax.f32 %v781, 1e-30
  %v816 = vmax.f32 %v782, 1e-30
  %v817 = vmax.f32 %v783, 1e-30
  %v818 = vmax.f32 %v784, 1e-30
  %v819 = vmax.f32 %v785, 1e-30
  %v820 = vmax.f32 %v786, 1e-30
  %v821 = vmax.f32 %v787, 1e-30
  %v822 = vmax.f32 %v788, 1e-30
  %v823 = vmax.f32 %v789, 1e-30
  %v824 = vmax.f32 %v790, 1e-30
  %v825 = vmax.f32 %v791, 1e-30
  %v826 = vmax.f32 %v792, 1e-30
  %v827 = vmax.f32 %v793, 1e-30
  %v828 = vmax.f32 %v794, 1e-30
  %v829 = vmax.f32 %v795, 1e-30
  %v830 = vrcp.pop %v813
  %v831 = vmul.f32 1.0, %v830
  %v832 = vrcp.pop %v814
  %v833 = vmul.f32 1.0, %v832
  %v834 = vrcp.pop %v815
  %v835 = vmul.f32 1.0, %v834
  %v836 = vrcp.pop %v816
  %v837 = vmul.f32 1.0, %v836
  %v838 = vrcp.pop %v817
  %v839 = vmul.f32 1.0, %v838
  %v840 = vrcp.pop %v818
  %v841 = vmul.f32 1.0, %v840
  %v842 = vrcp.pop %v819
  %v843 = vmul.f32 1.0, %v842
  %v844 = vrcp.pop %v820
  %v845 = vmul.f32 1.0, %v844
  %v846 = vrcp.pop %v821
  %v847 = vmul.f32 1.0, %v846
  %v848 = vrcp.pop %v822
  %v849 = vmul.f32 1.0, %v848
  %v850 = vrcp.pop %v823
  %v851 = vmul.f32 1.0, %v850
  %v852 = vrcp.pop %v824
  %v853 = vmul.f32 1.0, %v852
  %v854 = vrcp.pop %v825
  %v855 = vmul.f32 1.0, %v854
  %v856 = vrcp.pop %v826
  %v857 = vmul.f32 1.0, %v856
  %v858 = vrcp.pop %v827
  %v859 = vmul.f32 1.0, %v858
  %v860 = vrcp.pop %v828
  %v861 = vmul.f32 1.0, %v860
  %v862 = vrcp.pop %v829
  %v863 = vmul.f32 1.0, %v862
  %v864 = vmul.f32 %v711, %v831
  %v865 = vmul.f32 %v712, %v833
  %v866 = vmul.f32 %v713, %v835
  %v867 = vmul.f32 %v714, %v837
  %v868 = vmul.f32 %v715, %v839
  %v869 = vmul.f32 %v716, %v841
  %v870 = vmul.f32 %v717, %v843
  %v871 = vmul.f32 %v718, %v845
  %v872 = vmul.f32 %v719, %v847
  %v873 = vmul.f32 %v720, %v849
  %v874 = vmul.f32 %v721, %v851
  %v875 = vmul.f32 %v722, %v853
  %v876 = vmul.f32 %v723, %v855
  %v877 = vmul.f32 %v724, %v857
  %v878 = vmul.f32 %v725, %v859
  %v879 = vmul.f32 %v726, %v861
  %v880 = vmul.f32 %v727, %v863
  %v881 = vsel %vm796, %v864, 1.0
  %v882 = vsel %vm797, %v865, 1.0
  %v883 = vsel %vm798, %v866, 1.0
  %v884 = vsel %vm799, %v867, 1.0
  %v885 = vsel %vm800, %v868, 1.0
  %v886 = vsel %vm801, %v869, 1.0
  %v887 = vsel %vm802, %v870, 1.0
  %v888 = vsel %vm803, %v871, 1.0
  %v889 = vsel %vm804, %v872, 1.0
  %v890 = vsel %vm805, %v873, 1.0
  %v891 = vsel %vm806, %v874, 1.0
  %v892 = vsel %vm807, %v875, 1.0
  %v893 = vsel %vm808, %v876, 1.0
  %v894 = vsel %vm809, %v877, 1.0
  %v895 = vsel %vm810, %v878, 1.0
  %v896 = vsel %vm811, %v879, 1.0
  %v897 = vsel %vm812, %v880, 1.0
  %v898 = vmul.f32 %v762, %v831
  %v899 = vmul.f32 %v763, %v833
  %v900 = vmul.f32 %v764, %v835
  %v901 = vmul.f32 %v765, %v837
  %v902 = vmul.f32 %v766, %v839
  %v903 = vmul.f32 %v767, %v841
  %v904 = vmul.f32 %v768, %v843
  %v905 = vmul.f32 %v769, %v845
  %v906 = vmul.f32 %v770, %v847
  %v907 = vmul.f32 %v771, %v849
  %v908 = vmul.f32 %v772, %v851
  %v909 = vmul.f32 %v773, %v853
  %v910 = vmul.f32 %v774, %v855
  %v911 = vmul.f32 %v775, %v857
  %v912 = vmul.f32 %v776, %v859
  %v913 = vmul.f32 %v777, %v861
  %v914 = vmul.f32 %v778, %v863
  %v915 = vsel %vm796, %v898, 0.0
  %v916 = vsel %vm797, %v899, 0.0
  %v917 = vsel %vm798, %v900, 0.0
  %v918 = vsel %vm799, %v901, 0.0
  %v919 = vsel %vm800, %v902, 0.0
  %v920 = vsel %vm801, %v903, 0.0
  %v921 = vsel %vm802, %v904, 0.0
  %v922 = vsel %vm803, %v905, 0.0
  %v923 = vsel %vm804, %v906, 0.0
  %v924 = vsel %vm805, %v907, 0.0
  %v925 = vsel %vm806, %v908, 0.0
  %v926 = vsel %vm807, %v909, 0.0
  %v927 = vsel %vm808, %v910, 0.0
  %v928 = vsel %vm809, %v911, 0.0
  %v929 = vsel %vm810, %v912, 0.0
  %v930 = vsel %vm811, %v913, 0.0
  %v931 = vsel %vm812, %v914, 0.0
  %932 = vst [vmem:[%s3] sm:$0xff] %v660
  %933 = vst [vmem:[%s3 + $0x8] sm:$0xff] %v881
  %934 = vst [vmem:[%s3 + $0x10] sm:$0xff] %v915
  %935 = vst [vmem:[%s3 + $0x18] sm:$0xff] %v661
  %936 = vst [vmem:[%s3 + $0x20] sm:$0xff] %v882
  %937 = vst [vmem:[%s3 + $0x28] sm:$0xff] %v916
  %938 = vst [vmem:[%s3 + $0x30] sm:$0xff] %v662
  %939 = vst [vmem:[%s3 + $0x38] sm:$0xff] %v883
  %940 = vst [vmem:[%s3 + $0x40] sm:$0xff] %v917
  %941 = vst [vmem:[%s3 + $0x48] sm:$0xff] %v663
  %942 = vst [vmem:[%s3 + $0x50] sm:$0xff] %v884
  %943 = vst [vmem:[%s3 + $0x58] sm:$0xff] %v918
  %944 = vst [vmem:[%s3 + $0x60] sm:$0xff] %v664
  %945 = vst [vmem:[%s3 + $0x68] sm:$0xff] %v885
  %946 = vst [vmem:[%s3 + $0x70] sm:$0xff] %v919
  %947 = vst [vmem:[%s3 + $0x78] sm:$0xff] %v665
  %948 = vst [vmem:[%s3 + $0x80] sm:$0xff] %v886
  %949 = vst [vmem:[%s3 + $0x88] sm:$0xff] %v920
  %950 = vst [vmem:[%s3 + $0x90] sm:$0xff] %v666
  %951 = vst [vmem:[%s3 + $0x98] sm:$0xff] %v887
  %952 = vst [vmem:[%s3 + $0xa0] sm:$0xff] %v921
  %953 = vst [vmem:[%s3 + $0xa8] sm:$0xff] %v667
  %954 = vst [vmem:[%s3 + $0xb0] sm:$0xff] %v888
  %955 = vst [vmem:[%s3 + $0xb8] sm:$0xff] %v922
  %956 = vst [vmem:[%s3 + $0xc0] sm:$0xff] %v668
  %957 = vst [vmem:[%s3 + $0xc8] sm:$0xff] %v889
  %958 = vst [vmem:[%s3 + $0xd0] sm:$0xff] %v923
  %959 = vst [vmem:[%s3 + $0xd8] sm:$0xff] %v669
  %960 = vst [vmem:[%s3 + $0xe0] sm:$0xff] %v890
  %961 = vst [vmem:[%s3 + $0xe8] sm:$0xff] %v924
  %962 = vst [vmem:[%s3 + $0xf0] sm:$0xff] %v670
  %963 = vst [vmem:[%s3 + $0xf8] sm:$0xff] %v891
  %964 = vst [vmem:[%s3 + $0x100] sm:$0xff] %v925
  %965 = vst [vmem:[%s3 + $0x108] sm:$0xff] %v671
  %966 = vst [vmem:[%s3 + $0x110] sm:$0xff] %v892
  %967 = vst [vmem:[%s3 + $0x118] sm:$0xff] %v926
  %968 = vst [vmem:[%s3 + $0x120] sm:$0xff] %v672
  %969 = vst [vmem:[%s3 + $0x128] sm:$0xff] %v893
  %970 = vst [vmem:[%s3 + $0x130] sm:$0xff] %v927
  %971 = vst [vmem:[%s3 + $0x138] sm:$0xff] %v673
  %972 = vst [vmem:[%s3 + $0x140] sm:$0xff] %v894
  %973 = vst [vmem:[%s3 + $0x148] sm:$0xff] %v928
  %974 = vst [vmem:[%s3 + $0x150] sm:$0xff] %v674
  %975 = vst [vmem:[%s3 + $0x158] sm:$0xff] %v895
  %976 = vst [vmem:[%s3 + $0x160] sm:$0xff] %v929
  %977 = vst [vmem:[%s3 + $0x168] sm:$0xff] %v675
  %978 = vst [vmem:[%s3 + $0x170] sm:$0xff] %v896
  %979 = vst [vmem:[%s3 + $0x178] sm:$0xff] %v930
  %980 = vst [vmem:[%s3 + $0x180] sm:$0xff] %v676
  %981 = vst [vmem:[%s3 + $0x188] sm:$0xff] %v897
  %982 = vst [vmem:[%s3 + $0x190] sm:$0xff] %v931
  // Predicated region
  $region14: #{apply_pitch_shift.5} parent=0 // pred_check
    _
  $region15: #{apply_pitch_shift.5} parent=0 // pred_check_branch
    %984 = sbr.rel (0) target = $region17
  $region16: #{apply_pitch_shift.5} parent=0 // pred_region
    _
  $region17: #{apply_pitch_shift.5} parent=0 // pred_fallthru
    _
  // Predicated region
  $region18: #{apply_pitch_shift.5} parent=0 // pred_check
    _
  $region19: #{apply_pitch_shift.5} parent=0 // pred_check_branch
    %986 = sbr.rel (0) target = $region21
  $region20: #{apply_pitch_shift.5} parent=0 // pred_region
    _
  $region21: #{apply_pitch_shift.5} parent=0 // pred_fallthru
    _

// kernel: apply_pitch_shift.6
$region0: #{apply_pitch_shift.6}
  #allocation0 [shape = 'u32[]', space=smem, size = 0x4, offset = 0x4, fixed_abs, tag = 'smem constant byte address 0x4 - core index']
  #allocation1 [shape = 'u32[144,128]{1,0:T(1,128)}', space=vmem, size = 0x12000, scoped, tag = 'internal scratch']
  %s0 = inlined_call_operand.vmem [shape: f32[136,128], index: 0, kind: input, shape index: {}]
  %s1 = inlined_call_operand.vmem [shape: f32[136,128], index: 1, kind: input, shape index: {}]
  %s2 = inlined_call_operand.vmem [shape: f32[136,128], index: 2, kind: input, shape index: {}]
  %s3 = inlined_call_operand.vmem [shape: f32[256,128], index: 3, kind: input, shape index: {}]
  %s4 = inlined_call_operand.vmem [shape: f32[136,128], index: 4, kind: output, shape index: {}]
  %s5 = sld [smem:[#allocation0]]
  $region26: #{apply_pitch_shift.6} parent=0
    _
  %s7 = ssub.s32 1, %s5
  %s8 = scalar_select 0, %s7, %s5
  // Predicated region
  $region2: #{apply_pitch_shift.6} parent=0 // pred_check
    _
  $region3: #{apply_pitch_shift.6} parent=0 // pred_check_branch
    %10 = sbr.rel (0) target = $region5
  $region4: #{apply_pitch_shift.6} parent=0 // pred_region
    _
  $region5: #{apply_pitch_shift.6} parent=0 // pred_fallthru
    _
  // Predicated region
  $region6: #{apply_pitch_shift.6} parent=0 // pred_check
    _
  $region7: #{apply_pitch_shift.6} parent=0 // pred_check_branch
    %12 = sbr.rel (0) target = $region9
  $region8: #{apply_pitch_shift.6} parent=0 // pred_region
    _
  $region9: #{apply_pitch_shift.6} parent=0 // pred_fallthru
    _
  // Predicated region
  $region10: #{apply_pitch_shift.6} parent=0 // pred_check
    _
  $region11: #{apply_pitch_shift.6} parent=0 // pred_check_branch
    %14 = sbr.rel (0) target = $region13
  $region12: #{apply_pitch_shift.6} parent=0 // pred_region
    _
  $region13: #{apply_pitch_shift.6} parent=0 // pred_fallthru
    _
  // Predicated region
  $region14: #{apply_pitch_shift.6} parent=0 // pred_check
    _
  $region15: #{apply_pitch_shift.6} parent=0 // pred_check_branch
    %16 = sbr.rel (0) target = $region17
  $region16: #{apply_pitch_shift.6} parent=0 // pred_region
    _
  $region17: #{apply_pitch_shift.6} parent=0 // pred_fallthru
    _
  %v17 = vld [vmem:[%s0] sm:$0xff]
  %v18 = vld [vmem:[%s0 + $0x8] sm:$0xff]
  %v19 = vld [vmem:[%s0 + $0x10] sm:$0xff]
  %v20 = vld [vmem:[%s0 + $0x18] sm:$0xff]
  %v21 = vld [vmem:[%s0 + $0x20] sm:$0xff]
  %v22 = vld [vmem:[%s0 + $0x28] sm:$0xff]
  %v23 = vld [vmem:[%s0 + $0x30] sm:$0xff]
  %v24 = vld [vmem:[%s0 + $0x38] sm:$0xff]
  %v25 = vld [vmem:[%s0 + $0x40] sm:$0xff]
  %v26 = vld [vmem:[%s0 + $0x48] sm:$0xff]
  %v27 = vld [vmem:[%s0 + $0x50] sm:$0xff]
  %v28 = vld [vmem:[%s0 + $0x58] sm:$0xff]
  %v29 = vld [vmem:[%s0 + $0x60] sm:$0xff]
  %v30 = vld [vmem:[%s0 + $0x68] sm:$0xff]
  %v31 = vld [vmem:[%s0 + $0x70] sm:$0xff]
  %v32 = vld [vmem:[%s0 + $0x78] sm:$0xff]
  %v33 = vld [vmem:[%s0 + $0x80] sm:$0xff]
  %v34 = vld [vmem:[%s1] sm:$0xff]
  %v35 = vld [vmem:[%s1 + $0x8] sm:$0xff]
  %v36 = vld [vmem:[%s1 + $0x10] sm:$0xff]
  %v37 = vld [vmem:[%s1 + $0x18] sm:$0xff]
  %v38 = vld [vmem:[%s1 + $0x20] sm:$0xff]
  %v39 = vld [vmem:[%s1 + $0x28] sm:$0xff]
  %v40 = vld [vmem:[%s1 + $0x30] sm:$0xff]
  %v41 = vld [vmem:[%s1 + $0x38] sm:$0xff]
  %v42 = vld [vmem:[%s1 + $0x40] sm:$0xff]
  %v43 = vld [vmem:[%s1 + $0x48] sm:$0xff]
  %v44 = vld [vmem:[%s1 + $0x50] sm:$0xff]
  %v45 = vld [vmem:[%s1 + $0x58] sm:$0xff]
  %v46 = vld [vmem:[%s1 + $0x60] sm:$0xff]
  %v47 = vld [vmem:[%s1 + $0x68] sm:$0xff]
  %v48 = vld [vmem:[%s1 + $0x70] sm:$0xff]
  %v49 = vld [vmem:[%s1 + $0x78] sm:$0xff]
  %v50 = vld [vmem:[%s1 + $0x80] sm:$0xff]
  %v51 = vmul.f32 %v17, %v34
  %v52 = vmul.f32 %v18, %v35
  %v53 = vmul.f32 %v19, %v36
  %v54 = vmul.f32 %v20, %v37
  %v55 = vmul.f32 %v21, %v38
  %v56 = vmul.f32 %v22, %v39
  %v57 = vmul.f32 %v23, %v40
  %v58 = vmul.f32 %v24, %v41
  %v59 = vmul.f32 %v25, %v42
  %v60 = vmul.f32 %v26, %v43
  %v61 = vmul.f32 %v27, %v44
  %v62 = vmul.f32 %v28, %v45
  %v63 = vmul.f32 %v29, %v46
  %v64 = vmul.f32 %v30, %v47
  %v65 = vmul.f32 %v31, %v48
  %v66 = vmul.f32 %v32, %v49
  %v67 = vmul.f32 %v33, %v50
  %v68 = vld [vmem:[%s2] sm:$0xff]
  %v69 = vld [vmem:[%s2 + $0x8] sm:$0xff]
  %v70 = vld [vmem:[%s2 + $0x10] sm:$0xff]
  %v71 = vld [vmem:[%s2 + $0x18] sm:$0xff]
  %v72 = vld [vmem:[%s2 + $0x20] sm:$0xff]
  %v73 = vld [vmem:[%s2 + $0x28] sm:$0xff]
  %v74 = vld [vmem:[%s2 + $0x30] sm:$0xff]
  %v75 = vld [vmem:[%s2 + $0x38] sm:$0xff]
  %v76 = vld [vmem:[%s2 + $0x40] sm:$0xff]
  %v77 = vld [vmem:[%s2 + $0x48] sm:$0xff]
  %v78 = vld [vmem:[%s2 + $0x50] sm:$0xff]
  %v79 = vld [vmem:[%s2 + $0x58] sm:$0xff]
  %v80 = vld [vmem:[%s2 + $0x60] sm:$0xff]
  %v81 = vld [vmem:[%s2 + $0x68] sm:$0xff]
  %v82 = vld [vmem:[%s2 + $0x70] sm:$0xff]
  %v83 = vld [vmem:[%s2 + $0x78] sm:$0xff]
  %v84 = vld [vmem:[%s2 + $0x80] sm:$0xff]
  %v85 = vmul.f32 %v17, %v68
  %v86 = vmul.f32 %v18, %v69
  %v87 = vmul.f32 %v19, %v70
  %v88 = vmul.f32 %v20, %v71
  %v89 = vmul.f32 %v21, %v72
  %v90 = vmul.f32 %v22, %v73
  %v91 = vmul.f32 %v23, %v74
  %v92 = vmul.f32 %v24, %v75
  %v93 = vmul.f32 %v25, %v76
  %v94 = vmul.f32 %v26, %v77
  %v95 = vmul.f32 %v27, %v78
  %v96 = vmul.f32 %v28, %v79
  %v97 = vmul.f32 %v29, %v80
  %v98 = vmul.f32 %v30, %v81
  %v99 = vmul.f32 %v31, %v82
  %v100 = vmul.f32 %v32, %v83
  %v101 = vmul.f32 %v33, %v84
  %v102 = vld [vmem:[%s3] sm:$0xff]
  %v103 = vld [vmem:[%s3 + $0x8] sm:$0xff]
  %v104 = vld [vmem:[%s3 + $0x10] sm:$0xff]
  %v105 = vld [vmem:[%s3 + $0x18] sm:$0xff]
  %v106 = vld [vmem:[%s3 + $0x20] sm:$0xff]
  %v107 = vld [vmem:[%s3 + $0x28] sm:$0xff]
  %v108 = vld [vmem:[%s3 + $0x30] sm:$0xff]
  %v109 = vld [vmem:[%s3 + $0x38] sm:$0xff]
  %v110 = vld [vmem:[%s3 + $0x40] sm:$0xff]
  %v111 = vld [vmem:[%s3 + $0x48] sm:$0xff]
  %v112 = vld [vmem:[%s3 + $0x50] sm:$0xff]
  %v113 = vld [vmem:[%s3 + $0x58] sm:$0xff]
  %v114 = vld [vmem:[%s3 + $0x60] sm:$0xff]
  %v115 = vld [vmem:[%s3 + $0x68] sm:$0xff]
  %v116 = vld [vmem:[%s3 + $0x70] sm:$0xff]
  %v117 = vld [vmem:[%s3 + $0x78] sm:$0xff]
  %v118 = vld [vmem:[%s3 + $0x80] sm:$0xff]
  %v119 = vld [vmem:[%s3 + $0x88] sm:$0xff]
  %v120 = vld [vmem:[%s3 + $0x90] sm:$0xff]
  %v121 = vld [vmem:[%s3 + $0x98] sm:$0xff]
  %v122 = vld [vmem:[%s3 + $0xa0] sm:$0xff]
  %v123 = vld [vmem:[%s3 + $0xa8] sm:$0xff]
  %v124 = vld [vmem:[%s3 + $0xb0] sm:$0xff]
  %v125 = vld [vmem:[%s3 + $0xb8] sm:$0xff]
  %v126 = vld [vmem:[%s3 + $0xc0] sm:$0xff]
  %v127 = vld [vmem:[%s3 + $0xc8] sm:$0xff]
  %v128 = vld [vmem:[%s3 + $0xd0] sm:$0xff]
  %v129 = vld [vmem:[%s3 + $0xd8] sm:$0xff]
  %v130 = vld [vmem:[%s3 + $0xe0] sm:$0xff]
  %v131 = vld [vmem:[%s3 + $0xe8] sm:$0xff]
  %v132 = vld [vmem:[%s3 + $0xf0] sm:$0xff]
  %v133 = vld [vmem:[%s3 + $0xf8] sm:$0xff]
  %134 = vmatprep.subr.mxu0 0.0
  %135 = vmatpush1.msra.mxu0 %v117
  %136 = vmatprep.subr.mxu0 0.0
  %137 = vmatpush1.msra.mxu0 %v116
  %138 = vmatprep.subr.mxu0 0.0
  %139 = vmatpush1.msra.mxu0 %v115
  %140 = vmatprep.subr.mxu0 0.0
  %141 = vmatpush1.msra.mxu0 %v114
  %142 = vmatprep.subr.mxu0 0.0
  %143 = vmatpush1.msra.mxu0 %v113
  %144 = vmatprep.subr.mxu0 0.0
  %145 = vmatpush1.msra.mxu0 %v112
  %146 = vmatprep.subr.mxu0 0.0
  %147 = vmatpush1.msra.mxu0 %v111
  %148 = vmatprep.subr.mxu0 0.0
  %149 = vmatpush1.msra.mxu0 %v110
  %150 = vmatprep.subr.mxu0 0.0
  %151 = vmatpush1.msra.mxu0 %v109
  %152 = vmatprep.subr.mxu0 0.0
  %153 = vmatpush1.msra.mxu0 %v108
  %154 = vmatprep.subr.mxu0 0.0
  %155 = vmatpush1.msra.mxu0 %v107
  %156 = vmatprep.subr.mxu0 0.0
  %157 = vmatpush1.msra.mxu0 %v106
  %158 = vmatprep.subr.mxu0 0.0
  %159 = vmatpush1.msra.mxu0 %v105
  %160 = vmatprep.subr.mxu0 0.0
  %161 = vmatpush1.msra.mxu0 %v104
  %162 = vmatprep.subr.mxu0 0.0
  %163 = vmatpush1.msra.mxu0 %v103
  %164 = vmatprep.subr.mxu0 0.0
  %165 = vmatpush1.msra.mxu0 %v102
  %166 = vmatprep.subr.mxu0 0.0
  %167 = vmatpush2.msra.mxu0 %v133
  %168 = vmatprep.subr.mxu0 0.0
  %169 = vmatpush2.msra.mxu0 %v132
  %170 = vmatprep.subr.mxu0 0.0
  %171 = vmatpush2.msra.mxu0 %v131
  %172 = vmatprep.subr.mxu0 0.0
  %173 = vmatpush2.msra.mxu0 %v130
  %174 = vmatprep.subr.mxu0 0.0
  %175 = vmatpush2.msra.mxu0 %v129
  %176 = vmatprep.subr.mxu0 0.0
  %177 = vmatpush2.msra.mxu0 %v128
  %178 = vmatprep.subr.mxu0 0.0
  %179 = vmatpush2.msra.mxu0 %v127
  %180 = vmatprep.subr.mxu0 0.0
  %181 = vmatpush2.msra.mxu0 %v126
  %182 = vmatprep.subr.mxu0 0.0
  %183 = vmatpush2.msra.mxu0 %v125
  %184 = vmatprep.subr.mxu0 0.0
  %185 = vmatpush2.msra.mxu0 %v124
  %186 = vmatprep.subr.mxu0 0.0
  %187 = vmatpush2.msra.mxu0 %v123
  %188 = vmatprep.subr.mxu0 0.0
  %189 = vmatpush2.msra.mxu0 %v122
  %190 = vmatprep.subr.mxu0 0.0
  %191 = vmatpush2.msra.mxu0 %v121
  %192 = vmatprep.subr.mxu0 0.0
  %193 = vmatpush2.msra.mxu0 %v120
  %194 = vmatprep.subr.mxu0 0.0
  %195 = vmatpush2.msra.mxu0 %v119
  %196 = vmatprep.subr.mxu0 0.0
  %197 = vmatpush2.msra.mxu0 %v118
  %198 = vmatprep.mubr.f32.mxu0 %v85
  %199 = vmatmul.mubr.f32.gmra.mxu0 %v51
  %v200 = vpop.f32.mrf.mxu0
  %v201 = vadd.f32 0.0, %v200
  %v202 = vpop.f32.mrf.mxu0
  %203 = vmatprep.mubr.f32.mxu0 %v86
  %204 = vmatmul.mubr.f32.gmra.mxu0 %v52
  %v205 = vpop.f32.mrf.mxu0
  %v206 = vadd.f32 0.0, %v205
  %v207 = vpop.f32.mrf.mxu0
  %208 = vmatprep.mubr.f32.mxu0 %v87
  %209 = vmatmul.mubr.f32.gmra.mxu0 %v53
  %v210 = vpop.f32.mrf.mxu0
  %v211 = vadd.f32 0.0, %v210
  %v212 = vpop.f32.mrf.mxu0
  %213 = vmatprep.mubr.f32.mxu0 %v88
  %214 = vmatmul.mubr.f32.gmra.mxu0 %v54
  %v215 = vpop.f32.mrf.mxu0
  %v216 = vadd.f32 0.0, %v215
  %v217 = vpop.f32.mrf.mxu0
  %218 = vmatprep.mubr.f32.mxu0 %v89
  %219 = vmatmul.mubr.f32.gmra.mxu0 %v55
  %v220 = vpop.f32.mrf.mxu0
  %v221 = vadd.f32 0.0, %v220
  %v222 = vpop.f32.mrf.mxu0
  %223 = vmatprep.mubr.f32.mxu0 %v90
  %224 = vmatmul.mubr.f32.gmra.mxu0 %v56
  %v225 = vpop.f32.mrf.mxu0
  %v226 = vadd.f32 0.0, %v225
  %v227 = vpop.f32.mrf.mxu0
  %228 = vmatprep.mubr.f32.mxu0 %v91
  %229 = vmatmul.mubr.f32.gmra.mxu0 %v57
  %v230 = vpop.f32.mrf.mxu0
  %v231 = vadd.f32 0.0, %v230
  %v232 = vpop.f32.mrf.mxu0
  %233 = vmatprep.mubr.f32.mxu0 %v92
  %234 = vmatmul.mubr.f32.gmra.mxu0 %v58
  %v235 = vpop.f32.mrf.mxu0
  %v236 = vadd.f32 0.0, %v235
  %v237 = vpop.f32.mrf.mxu0
  %238 = vmatprep.mubr.f32.mxu0 %v93
  %239 = vmatmul.mubr.f32.gmra.mxu0 %v59
  %v240 = vpop.f32.mrf.mxu0
  %v241 = vadd.f32 0.0, %v240
  %v242 = vpop.f32.mrf.mxu0
  %243 = vmatprep.mubr.f32.mxu0 %v94
  %244 = vmatmul.mubr.f32.gmra.mxu0 %v60
  %v245 = vpop.f32.mrf.mxu0
  %v246 = vadd.f32 0.0, %v245
  %v247 = vpop.f32.mrf.mxu0
  %248 = vmatprep.mubr.f32.mxu0 %v95
  %249 = vmatmul.mubr.f32.gmra.mxu0 %v61
  %v250 = vpop.f32.mrf.mxu0
  %v251 = vadd.f32 0.0, %v250
  %v252 = vpop.f32.mrf.mxu0
  %253 = vmatprep.mubr.f32.mxu0 %v96
  %254 = vmatmul.mubr.f32.gmra.mxu0 %v62
  %v255 = vpop.f32.mrf.mxu0
  %v256 = vadd.f32 0.0, %v255
  %v257 = vpop.f32.mrf.mxu0
  %258 = vmatprep.mubr.f32.mxu0 %v97
  %259 = vmatmul.mubr.f32.gmra.mxu0 %v63
  %v260 = vpop.f32.mrf.mxu0
  %v261 = vadd.f32 0.0, %v260
  %v262 = vpop.f32.mrf.mxu0
  %263 = vmatprep.mubr.f32.mxu0 %v98
  %264 = vmatmul.mubr.f32.gmra.mxu0 %v64
  %v265 = vpop.f32.mrf.mxu0
  %v266 = vadd.f32 0.0, %v265
  %v267 = vpop.f32.mrf.mxu0
  %268 = vmatprep.mubr.f32.mxu0 %v99
  %269 = vmatmul.mubr.f32.gmra.mxu0 %v65
  %v270 = vpop.f32.mrf.mxu0
  %v271 = vadd.f32 0.0, %v270
  %v272 = vpop.f32.mrf.mxu0
  %273 = vmatprep.mubr.f32.mxu0 %v100
  %274 = vmatmul.mubr.f32.gmra.mxu0 %v66
  %v275 = vpop.f32.mrf.mxu0
  %v276 = vadd.f32 0.0, %v275
  %v277 = vpop.f32.mrf.mxu0
  %278 = vmatprep.mubr.f32.mxu0 %v101
  %279 = vmatmul.mubr.f32.gmra.mxu0 %v67
  %v280 = vpop.f32.mrf.mxu0
  %v281 = vadd.f32 0.0, %v280
  %v282 = vpop.f32.mrf.mxu0
  %283 = vdwg.mxu0
  %284 = vst [vmem:[%s4] sm:$0xff] %v201
  %285 = vst [vmem:[%s4 + $0x8] sm:$0xff] %v206
  %286 = vst [vmem:[%s4 + $0x10] sm:$0xff] %v211
  %287 = vst [vmem:[%s4 + $0x18] sm:$0xff] %v216
  %288 = vst [vmem:[%s4 + $0x20] sm:$0xff] %v221
  %289 = vst [vmem:[%s4 + $0x28] sm:$0xff] %v226
  %290 = vst [vmem:[%s4 + $0x30] sm:$0xff] %v231
  %291 = vst [vmem:[%s4 + $0x38] sm:$0xff] %v236
  %292 = vst [vmem:[%s4 + $0x40] sm:$0xff] %v241
  %293 = vst [vmem:[%s4 + $0x48] sm:$0xff] %v246
  %294 = vst [vmem:[%s4 + $0x50] sm:$0xff] %v251
  %295 = vst [vmem:[%s4 + $0x58] sm:$0xff] %v256
  %296 = vst [vmem:[%s4 + $0x60] sm:$0xff] %v261
  %297 = vst [vmem:[%s4 + $0x68] sm:$0xff] %v266
  %298 = vst [vmem:[%s4 + $0x70] sm:$0xff] %v271
  %299 = vst [vmem:[%s4 + $0x78] sm:$0xff] %v276
  %300 = vst [vmem:[%s4 + $0x80] sm:$0xff] %v281
  // Predicated region
  $region18: #{apply_pitch_shift.6} parent=0 // pred_check
    _
  $region19: #{apply_pitch_shift.6} parent=0 // pred_check_branch
    %302 = sbr.rel (0) target = $region21
  $region20: #{apply_pitch_shift.6} parent=0 // pred_region
    _
  $region21: #{apply_pitch_shift.6} parent=0 // pred_fallthru
    _
  // Predicated region
  $region22: #{apply_pitch_shift.6} parent=0 // pred_check
    _
  $region23: #{apply_pitch_shift.6} parent=0 // pred_check_branch
    %304 = sbr.rel (0) target = $region25
  $region24: #{apply_pitch_shift.6} parent=0 // pred_region
    _
  $region25: #{apply_pitch_shift.6} parent=0 // pred_fallthru
    _

// kernel: apply_pitch_shift.7
$region0: #{apply_pitch_shift.7}
  #allocation0 [shape = 'u32[]', space=smem, size = 0x4, offset = 0x4, fixed_abs, tag = 'smem constant byte address 0x4 - core index']
  #allocation1 [shape = 'u32[144,128]{1,0:T(1,128)}', space=vmem, size = 0x12000, scoped, tag = 'internal scratch']
  %s0 = inlined_call_operand.vmem [shape: f32[1,28], index: 0, kind: input, shape index: {}]
  %s1 = inlined_call_operand.vmem [shape: f32[28,2176], index: 1, kind: input, shape index: {}]
  %s2 = inlined_call_operand.vmem [shape: f32[1,2176], index: 2, kind: output, shape index: {}]
  %s3 = sld [smem:[#allocation0]]
  $region18: #{apply_pitch_shift.7} parent=0
    _
  %s5 = ssub.s32 1, %s3
  %s6 = scalar_select 0, %s5, %s3
  // Predicated region
  $region2: #{apply_pitch_shift.7} parent=0 // pred_check
    _
  $region3: #{apply_pitch_shift.7} parent=0 // pred_check_branch
    %8 = sbr.rel (0) target = $region5
  $region4: #{apply_pitch_shift.7} parent=0 // pred_region
    _
  $region5: #{apply_pitch_shift.7} parent=0 // pred_fallthru
    _
  // Predicated region
  $region6: #{apply_pitch_shift.7} parent=0 // pred_check
    _
  $region7: #{apply_pitch_shift.7} parent=0 // pred_check_branch
    %10 = sbr.rel (0) target = $region9
  $region8: #{apply_pitch_shift.7} parent=0 // pred_region
    _
  $region9: #{apply_pitch_shift.7} parent=0 // pred_fallthru
    _
  %v11 = vld [vmem:[%s0] sm:$0x1]
  %v12 = vld [vmem:[%s1] sm:$0xff]
  %v13 = vld [vmem:[%s1 + $0x8] sm:$0xff]
  %v14 = vld [vmem:[%s1 + $0x10] sm:$0xff]
  %v15 = vld [vmem:[%s1 + $0x18] sm:$0xff]
  %v16 = vld [vmem:[%s1 + $0x20] sm:$0xff]
  %v17 = vld [vmem:[%s1 + $0x28] sm:$0xff]
  %v18 = vld [vmem:[%s1 + $0x30] sm:$0xff]
  %v19 = vld [vmem:[%s1 + $0x38] sm:$0xff]
  %v20 = vld [vmem:[%s1 + $0x40] sm:$0xff]
  %v21 = vld [vmem:[%s1 + $0x48] sm:$0xff]
  %v22 = vld [vmem:[%s1 + $0x50] sm:$0xff]
  %v23 = vld [vmem:[%s1 + $0x58] sm:$0xff]
  %v24 = vld [vmem:[%s1 + $0x60] sm:$0xff]
  %v25 = vld [vmem:[%s1 + $0x68] sm:$0xff]
  %v26 = vld [vmem:[%s1 + $0x70] sm:$0xff]
  %v27 = vld [vmem:[%s1 + $0x78] sm:$0xff]
  %v28 = vld [vmem:[%s1 + $0x80] sm:$0xff]
  %v29 = vld [vmem:[%s1 + $0x88] sm:$0xff]
  %v30 = vld [vmem:[%s1 + $0x90] sm:$0xff]
  %v31 = vld [vmem:[%s1 + $0x98] sm:$0xff]
  %v32 = vld [vmem:[%s1 + $0xa0] sm:$0xff]
  %v33 = vld [vmem:[%s1 + $0xa8] sm:$0xff]
  %v34 = vld [vmem:[%s1 + $0xb0] sm:$0xff]
  %v35 = vld [vmem:[%s1 + $0xb8] sm:$0xff]
  %v36 = vld [vmem:[%s1 + $0xc0] sm:$0xff]
  %v37 = vld [vmem:[%s1 + $0xc8] sm:$0xff]
  %v38 = vld [vmem:[%s1 + $0xd0] sm:$0xff]
  %v39 = vld [vmem:[%s1 + $0xd8] sm:$0xff]
  %v40 = vld [vmem:[%s1 + $0xe0] sm:$0xff]
  %v41 = vld [vmem:[%s1 + $0xe8] sm:$0xff]
  %v42 = vld [vmem:[%s1 + $0xf0] sm:$0xff]
  %v43 = vld [vmem:[%s1 + $0xf8] sm:$0xff]
  %v44 = vld [vmem:[%s1 + $0x100] sm:$0xff]
  %v45 = vld [vmem:[%s1 + $0x108] sm:$0xff]
  %v46 = vld [vmem:[%s1 + $0x110] sm:$0xff]
  %v47 = vld [vmem:[%s1 + $0x118] sm:$0xff]
  %v48 = vld [vmem:[%s1 + $0x120] sm:$0xff]
  %v49 = vld [vmem:[%s1 + $0x128] sm:$0xff]
  %v50 = vld [vmem:[%s1 + $0x130] sm:$0xff]
  %v51 = vld [vmem:[%s1 + $0x138] sm:$0xff]
  %v52 = vld [vmem:[%s1 + $0x140] sm:$0xff]
  %v53 = vld [vmem:[%s1 + $0x148] sm:$0xff]
  %v54 = vld [vmem:[%s1 + $0x150] sm:$0xff]
  %v55 = vld [vmem:[%s1 + $0x158] sm:$0xff]
  %v56 = vld [vmem:[%s1 + $0x160] sm:$0xff]
  %v57 = vld [vmem:[%s1 + $0x168] sm:$0xff]
  %v58 = vld [vmem:[%s1 + $0x170] sm:$0xff]
  %v59 = vld [vmem:[%s1 + $0x178] sm:$0xff]
  %v60 = vld [vmem:[%s1 + $0x180] sm:$0xff]
  %v61 = vld [vmem:[%s1 + $0x188] sm:$0xff]
  %v62 = vld [vmem:[%s1 + $0x190] sm:$0xff]
  %v63 = vld [vmem:[%s1 + $0x198] sm:$0xf]
  %v64 = vld [vmem:[%s1 + $0x1a0] sm:$0xf]
  %v65 = vld [vmem:[%s1 + $0x1a8] sm:$0xf]
  %v66 = vld [vmem:[%s1 + $0x1b0] sm:$0xf]
  %v67 = vld [vmem:[%s1 + $0x1b8] sm:$0xf]
  %v68 = vld [vmem:[%s1 + $0x1c0] sm:$0xf]
  %v69 = vld [vmem:[%s1 + $0x1c8] sm:$0xf]
  %v70 = vld [vmem:[%s1 + $0x1d0] sm:$0xf]
  %v71 = vld [vmem:[%s1 + $0x1d8] sm:$0xf]
  %v72 = vld [vmem:[%s1 + $0x1e0] sm:$0xf]
  %v73 = vld [vmem:[%s1 + $0x1e8] sm:$0xf]
  %v74 = vld [vmem:[%s1 + $0x1f0] sm:$0xf]
  %v75 = vld [vmem:[%s1 + $0x1f8] sm:$0xf]
  %v76 = vld [vmem:[%s1 + $0x200] sm:$0xf]
  %v77 = vld [vmem:[%s1 + $0x208] sm:$0xf]
  %v78 = vld [vmem:[%s1 + $0x210] sm:$0xf]
  %v79 = vld [vmem:[%s1 + $0x218] sm:$0xf]
  %vm80 = vcmask 228352
  %v82 = vsel %vm80, %v11, 0
  %vm84 = vcmask 1043456
  %v86 = vsel %vm84, %v63, 0
  %v89 = vsel %vm84, %v64, 0
  %v92 = vsel %vm84, %v65, 0
  %v95 = vsel %vm84, %v66, 0
  %v98 = vsel %vm84, %v67, 0
  %v101 = vsel %vm84, %v68, 0
  %v104 = vsel %vm84, %v69, 0
  %v107 = vsel %vm84, %v70, 0
  %v110 = vsel %vm84, %v71, 0
  %v113 = vsel %vm84, %v72, 0
  %v116 = vsel %vm84, %v73, 0
  %v119 = vsel %vm84, %v74, 0
  %v122 = vsel %vm84, %v75, 0
  %v125 = vsel %vm84, %v76, 0
  %v128 = vsel %vm84, %v77, 0
  %v131 = vsel %vm84, %v78, 0
  %v134 = vsel %vm84, %v79, 0
  %136 = vmatprep.subr.mxu0 0.0
  %137 = vmatpush1.msra.mxu0 0.0
  %138 = vmatprep.subr.mxu0 0.0
  %139 = vmatpush1.msra.mxu0 0.0
  %140 = vmatprep.subr.mxu0 0.0
  %141 = vmatpush1.msra.mxu0 0.0
  %142 = vmatprep.subr.mxu0 0.0
  %143 = vmatpush1.msra.mxu0 0.0
  %144 = vmatprep.subr.mxu0 0.0
  %145 = vmatpush1.msra.mxu0 0.0
  %146 = vmatprep.subr.mxu0 0.0
  %147 = vmatpush1.msra.mxu0 0.0
  %148 = vmatprep.subr.mxu0 0.0
  %149 = vmatpush1.msra.mxu0 0.0
  %150 = vmatprep.subr.mxu0 0.0
  %151 = vmatpush1.msra.mxu0 0.0
  %152 = vmatprep.subr.mxu0 0.0
  %153 = vmatpush1.msra.mxu0 0.0
  %154 = vmatprep.subr.mxu0 0.0
  %155 = vmatpush1.msra.mxu0 0.0
  %156 = vmatprep.subr.mxu0 0.0
  %157 = vmatpush1.msra.mxu0 0.0
  %158 = vmatprep.subr.mxu0 0.0
  %159 = vmatpush1.msra.mxu0 0.0
  %160 = vmatprep.subr.mxu0 %v89
  %161 = vmatpush1.msra.mxu0 %v86
  %162 = vmatprep.subr.mxu0 %v47
  %163 = vmatpush1.msra.mxu0 %v46
  %164 = vmatprep.subr.mxu0 %v30
  %165 = vmatpush1.msra.mxu0 %v29
  %166 = vmatprep.subr.mxu0 %v13
  %167 = vmatpush1.msra.mxu0 %v12
  %168 = vmatprep.subr.mxu0 0.0
  %169 = vmatpush2.msra.mxu0 0.0
  %170 = vmatprep.subr.mxu0 0.0
  %171 = vmatpush2.msra.mxu0 0.0
  %172 = vmatprep.subr.mxu0 0.0
  %173 = vmatpush2.msra.mxu0 0.0
  %174 = vmatprep.subr.mxu0 0.0
  %175 = vmatpush2.msra.mxu0 0.0
  %176 = vmatprep.subr.mxu0 0.0
  %177 = vmatpush2.msra.mxu0 0.0
  %178 = vmatprep.subr.mxu0 0.0
  %179 = vmatpush2.msra.mxu0 0.0
  %180 = vmatprep.subr.mxu0 0.0
  %181 = vmatpush2.msra.mxu0 0.0
  %182 = vmatprep.subr.mxu0 0.0
  %183 = vmatpush2.msra.mxu0 0.0
  %184 = vmatprep.subr.mxu0 0.0
  %185 = vmatpush2.msra.mxu0 0.0
  %186 = vmatprep.subr.mxu0 0.0
  %187 = vmatpush2.msra.mxu0 0.0
  %188 = vmatprep.subr.mxu0 0.0
  %189 = vmatpush2.msra.mxu0 0.0
  %190 = vmatprep.subr.mxu0 0.0
  %191 = vmatpush2.msra.mxu0 0.0
  %192 = vmatprep.subr.mxu0 0.0
  %193 = vmatpush2.msra.mxu0 0.0
  %194 = vmatprep.subr.mxu0 0.0
  %195 = vmatpush2.msra.mxu0 0.0
  %196 = vmatprep.subr.mxu0 0.0
  %197 = vmatpush2.msra.mxu0 0.0
  %198 = vmatprep.subr.mxu0 0.0
  %199 = vmatpush2.msra.mxu0 0.0
  %200 = vmatprep.mubr.f32.mxu0 0.0
  %201 = vmatmul.mubr.f32.gmra.mxu0 %v82
  %v202 = vpop.f32.mrf.mxu0
  %v203 = vadd.f32 0.0, %v202
  %v204 = vpop.f32.mrf.mxu0
  %v205 = vadd.f32 0.0, %v204
  %206 = vdwg.mxu0
  %207 = vmatprep.subr.mxu0 0.0
  %208 = vmatpush1.msra.mxu0 0.0
  %209 = vmatprep.subr.mxu0 0.0
  %210 = vmatpush1.msra.mxu0 0.0
  %211 = vmatprep.subr.mxu0 0.0
  %212 = vmatpush1.msra.mxu0 0.0
  %213 = vmatprep.subr.mxu0 0.0
  %214 = vmatpush1.msra.mxu0 0.0
  %215 = vmatprep.subr.mxu0 0.0
  %216 = vmatpush1.msra.mxu0 0.0
  %217 = vmatprep.subr.mxu0 0.0
  %218 = vmatpush1.msra.mxu0 0.0
  %219 = vmatprep.subr.mxu0 0.0
  %220 = vmatpush1.msra.mxu0 0.0
  %221 = vmatprep.subr.mxu0 0.0
  %222 = vmatpush1.msra.mxu0 0.0
  %223 = vmatprep.subr.mxu0 0.0
  %224 = vmatpush1.msra.mxu0 0.0
  %225 = vmatprep.subr.mxu0 0.0
  %226 = vmatpush1.msra.mxu0 0.0
  %227 = vmatprep.subr.mxu0 0.0
  %228 = vmatpush1.msra.mxu0 0.0
  %229 = vmatprep.subr.mxu0 0.0
  %230 = vmatpush1.msra.mxu0 0.0
  %231 = vmatprep.subr.mxu0 %v95
  %232 = vmatpush1.msra.mxu0 %v92
  %233 = vmatprep.subr.mxu0 %v49
  %234 = vmatpush1.msra.mxu0 %v48
  %235 = vmatprep.subr.mxu0 %v32
  %236 = vmatpush1.msra.mxu0 %v31
  %237 = vmatprep.subr.mxu0 %v15
  %238 = vmatpush1.msra.mxu0 %v14
  %239 = vmatprep.subr.mxu0 0.0
  %240 = vmatpush2.msra.mxu0 0.0
  %241 = vmatprep.subr.mxu0 0.0
  %242 = vmatpush2.msra.mxu0 0.0
  %243 = vmatprep.subr.mxu0 0.0
  %244 = vmatpush2.msra.mxu0 0.0
  %245 = vmatprep.subr.mxu0 0.0
  %246 = vmatpush2.msra.mxu0 0.0
  %247 = vmatprep.subr.mxu0 0.0
  %248 = vmatpush2.msra.mxu0 0.0
  %249 = vmatprep.subr.mxu0 0.0
  %250 = vmatpush2.msra.mxu0 0.0
  %251 = vmatprep.subr.mxu0 0.0
  %252 = vmatpush2.msra.mxu0 0.0
  %253 = vmatprep.subr.mxu0 0.0
  %254 = vmatpush2.msra.mxu0 0.0
  %255 = vmatprep.subr.mxu0 0.0
  %256 = vmatpush2.msra.mxu0 0.0
  %257 = vmatprep.subr.mxu0 0.0
  %258 = vmatpush2.msra.mxu0 0.0
  %259 = vmatprep.subr.mxu0 0.0
  %260 = vmatpush2.msra.mxu0 0.0
  %261 = vmatprep.subr.mxu0 0.0
  %262 = vmatpush2.msra.mxu0 0.0
  %263 = vmatprep.subr.mxu0 0.0
  %264 = vmatpush2.msra.mxu0 0.0
  %265 = vmatprep.subr.mxu0 0.0
  %266 = vmatpush2.msra.mxu0 0.0
  %267 = vmatprep.subr.mxu0 0.0
  %268 = vmatpush2.msra.mxu0 0.0
  %269 = vmatprep.subr.mxu0 0.0
  %270 = vmatpush2.msra.mxu0 0.0
  %271 = vmatprep.mubr.f32.mxu0 0.0
  %272 = vmatmul.mubr.f32.gmra.mxu0 %v82
  %v273 = vpop.f32.mrf.mxu0
  %v274 = vadd.f32 0.0, %v273
  %v275 = vpop.f32.mrf.mxu0
  %v276 = vadd.f32 0.0, %v275
  %277 = vdwg.mxu0
  %278 = vmatprep.subr.mxu0 0.0
  %279 = vmatpush1.msra.mxu0 0.0
  %280 = vmatprep.subr.mxu0 0.0
  %281 = vmatpush1.msra.mxu0 0.0
  %282 = vmatprep.subr.mxu0 0.0
  %283 = vmatpush1.msra.mxu0 0.0
  %284 = vmatprep.subr.mxu0 0.0
  %285 = vmatpush1.msra.mxu0 0.0
  %286 = vmatprep.subr.mxu0 0.0
  %287 = vmatpush1.msra.mxu0 0.0
  %288 = vmatprep.subr.mxu0 0.0
  %289 = vmatpush1.msra.mxu0 0.0
  %290 = vmatprep.subr.mxu0 0.0
  %291 = vmatpush1.msra.mxu0 0.0
  %292 = vmatprep.subr.mxu0 0.0
  %293 = vmatpush1.msra.mxu0 0.0
  %294 = vmatprep.subr.mxu0 0.0
  %295 = vmatpush1.msra.mxu0 0.0
  %296 = vmatprep.subr.mxu0 0.0
  %297 = vmatpush1.msra.mxu0 0.0
  %298 = vmatprep.subr.mxu0 0.0
  %299 = vmatpush1.msra.mxu0 0.0
  %300 = vmatprep.subr.mxu0 0.0
  %301 = vmatpush1.msra.mxu0 0.0
  %302 = vmatprep.subr.mxu0 %v101
  %303 = vmatpush1.msra.mxu0 %v98
  %304 = vmatprep.subr.mxu0 %v51
  %305 = vmatpush1.msra.mxu0 %v50
  %306 = vmatprep.subr.mxu0 %v34
  %307 = vmatpush1.msra.mxu0 %v33
  %308 = vmatprep.subr.mxu0 %v17
  %309 = vmatpush1.msra.mxu0 %v16
  %310 = vmatprep.subr.mxu0 0.0
  %311 = vmatpush2.msra.mxu0 0.0
  %312 = vmatprep.subr.mxu0 0.0
  %313 = vmatpush2.msra.mxu0 0.0
  %314 = vmatprep.subr.mxu0 0.0
  %315 = vmatpush2.msra.mxu0 0.0
  %316 = vmatprep.subr.mxu0 0.0
  %317 = vmatpush2.msra.mxu0 0.0
  %318 = vmatprep.subr.mxu0 0.0
  %319 = vmatpush2.msra.mxu0 0.0
  %320 = vmatprep.subr.mxu0 0.0
  %321 = vmatpush2.msra.mxu0 0.0
  %322 = vmatprep.subr.mxu0 0.0
  %323 = vmatpush2.msra.mxu0 0.0
  %324 = vmatprep.subr.mxu0 0.0
  %325 = vmatpush2.msra.mxu0 0.0
  %326 = vmatprep.subr.mxu0 0.0
  %327 = vmatpush2.msra.mxu0 0.0
  %328 = vmatprep.subr.mxu0 0.0
  %329 = vmatpush2.msra.mxu0 0.0
  %330 = vmatprep.subr.mxu0 0.0
  %331 = vmatpush2.msra.mxu0 0.0
  %332 = vmatprep.subr.mxu0 0.0
  %333 = vmatpush2.msra.mxu0 0.0
  %334 = vmatprep.subr.mxu0 0.0
  %335 = vmatpush2.msra.mxu0 0.0
  %336 = vmatprep.subr.mxu0 0.0
  %337 = vmatpush2.msra.mxu0 0.0
  %338 = vmatprep.subr.mxu0 0.0
  %339 = vmatpush2.msra.mxu0 0.0
  %340 = vmatprep.subr.mxu0 0.0
  %341 = vmatpush2.msra.mxu0 0.0
  %342 = vmatprep.mubr.f32.mxu0 0.0
  %343 = vmatmul.mubr.f32.gmra.mxu0 %v82
  %v344 = vpop.f32.mrf.mxu0
  %v345 = vadd.f32 0.0, %v344
  %v346 = vpop.f32.mrf.mxu0
  %v347 = vadd.f32 0.0, %v346
  %348 = vdwg.mxu0
  %349 = vmatprep.subr.mxu0 0.0
  %350 = vmatpush1.msra.mxu0 0.0
  %351 = vmatprep.subr.mxu0 0.0
  %352 = vmatpush1.msra.mxu0 0.0
  %353 = vmatprep.subr.mxu0 0.0
  %354 = vmatpush1.msra.mxu0 0.0
  %355 = vmatprep.subr.mxu0 0.0
  %356 = vmatpush1.msra.mxu0 0.0
  %357 = vmatprep.subr.mxu0 0.0
  %358 = vmatpush1.msra.mxu0 0.0
  %359 = vmatprep.subr.mxu0 0.0
  %360 = vmatpush1.msra.mxu0 0.0
  %361 = vmatprep.subr.mxu0 0.0
  %362 = vmatpush1.msra.mxu0 0.0
  %363 = vmatprep.subr.mxu0 0.0
  %364 = vmatpush1.msra.mxu0 0.0
  %365 = vmatprep.subr.mxu0 0.0
  %366 = vmatpush1.msra.mxu0 0.0
  %367 = vmatprep.subr.mxu0 0.0
  %368 = vmatpush1.msra.mxu0 0.0
  %369 = vmatprep.subr.mxu0 0.0
  %370 = vmatpush1.msra.mxu0 0.0
  %371 = vmatprep.subr.mxu0 0.0
  %372 = vmatpush1.msra.mxu0 0.0
  %373 = vmatprep.subr.mxu0 %v107
  %374 = vmatpush1.msra.mxu0 %v104
  %375 = vmatprep.subr.mxu0 %v53
  %376 = vmatpush1.msra.mxu0 %v52
  %377 = vmatprep.subr.mxu0 %v36
  %378 = vmatpush1.msra.mxu0 %v35
  %379 = vmatprep.subr.mxu0 %v19
  %380 = vmatpush1.msra.mxu0 %v18
  %381 = vmatprep.subr.mxu0 0.0
  %382 = vmatpush2.msra.mxu0 0.0
  %383 = vmatprep.subr.mxu0 0.0
  %384 = vmatpush2.msra.mxu0 0.0
  %385 = vmatprep.subr.mxu0 0.0
  %386 = vmatpush2.msra.mxu0 0.0
  %387 = vmatprep.subr.mxu0 0.0
  %388 = vmatpush2.msra.mxu0 0.0
  %389 = vmatprep.subr.mxu0 0.0
  %390 = vmatpush2.msra.mxu0 0.0
  %391 = vmatprep.subr.mxu0 0.0
  %392 = vmatpush2.msra.mxu0 0.0
  %393 = vmatprep.subr.mxu0 0.0
  %394 = vmatpush2.msra.mxu0 0.0
  %395 = vmatprep.subr.mxu0 0.0
  %396 = vmatpush2.msra.mxu0 0.0
  %397 = vmatprep.subr.mxu0 0.0
  %398 = vmatpush2.msra.mxu0 0.0
  %399 = vmatprep.subr.mxu0 0.0
  %400 = vmatpush2.msra.mxu0 0.0
  %401 = vmatprep.subr.mxu0 0.0
  %402 = vmatpush2.msra.mxu0 0.0
  %403 = vmatprep.subr.mxu0 0.0
  %404 = vmatpush2.msra.mxu0 0.0
  %405 = vmatprep.subr.mxu0 0.0
  %406 = vmatpush2.msra.mxu0 0.0
  %407 = vmatprep.subr.mxu0 0.0
  %408 = vmatpush2.msra.mxu0 0.0
  %409 = vmatprep.subr.mxu0 0.0
  %410 = vmatpush2.msra.mxu0 0.0
  %411 = vmatprep.subr.mxu0 0.0
  %412 = vmatpush2.msra.mxu0 0.0
  %413 = vmatprep.mubr.f32.mxu0 0.0
  %414 = vmatmul.mubr.f32.gmra.mxu0 %v82
  %v415 = vpop.f32.mrf.mxu0
  %v416 = vadd.f32 0.0, %v415
  %v417 = vpop.f32.mrf.mxu0
  %v418 = vadd.f32 0.0, %v417
  %419 = vdwg.mxu0
  %420 = vmatprep.subr.mxu0 0.0
  %421 = vmatpush1.msra.mxu0 0.0
  %422 = vmatprep.subr.mxu0 0.0
  %423 = vmatpush1.msra.mxu0 0.0
  %424 = vmatprep.subr.mxu0 0.0
  %425 = vmatpush1.msra.mxu0 0.0
  %426 = vmatprep.subr.mxu0 0.0
  %427 = vmatpush1.msra.mxu0 0.0
  %428 = vmatprep.subr.mxu0 0.0
  %429 = vmatpush1.msra.mxu0 0.0
  %430 = vmatprep.subr.mxu0 0.0
  %431 = vmatpush1.msra.mxu0 0.0
  %432 = vmatprep.subr.mxu0 0.0
  %433 = vmatpush1.msra.mxu0 0.0
  %434 = vmatprep.subr.mxu0 0.0
  %435 = vmatpush1.msra.mxu0 0.0
  %436 = vmatprep.subr.mxu0 0.0
  %437 = vmatpush1.msra.mxu0 0.0
  %438 = vmatprep.subr.mxu0 0.0
  %439 = vmatpush1.msra.mxu0 0.0
  %440 = vmatprep.subr.mxu0 0.0
  %441 = vmatpush1.msra.mxu0 0.0
  %442 = vmatprep.subr.mxu0 0.0
  %443 = vmatpush1.msra.mxu0 0.0
  %444 = vmatprep.subr.mxu0 %v113
  %445 = vmatpush1.msra.mxu0 %v110
  %446 = vmatprep.subr.mxu0 %v55
  %447 = vmatpush1.msra.mxu0 %v54
  %448 = vmatprep.subr.mxu0 %v38
  %449 = vmatpush1.msra.mxu0 %v37
  %450 = vmatprep.subr.mxu0 %v21
  %451 = vmatpush1.msra.mxu0 %v20
  %452 = vmatprep.subr.mxu0 0.0
  %453 = vmatpush2.msra.mxu0 0.0
  %454 = vmatprep.subr.mxu0 0.0
  %455 = vmatpush2.msra.mxu0 0.0
  %456 = vmatprep.subr.mxu0 0.0
  %457 = vmatpush2.msra.mxu0 0.0
  %458 = vmatprep.subr.mxu0 0.0
  %459 = vmatpush2.msra.mxu0 0.0
  %460 = vmatprep.subr.mxu0 0.0
  %461 = vmatpush2.msra.mxu0 0.0
  %462 = vmatprep.subr.mxu0 0.0
  %463 = vmatpush2.msra.mxu0 0.0
  %464 = vmatprep.subr.mxu0 0.0
  %465 = vmatpush2.msra.mxu0 0.0
  %466 = vmatprep.subr.mxu0 0.0
  %467 = vmatpush2.msra.mxu0 0.0
  %468 = vmatprep.subr.mxu0 0.0
  %469 = vmatpush2.msra.mxu0 0.0
  %470 = vmatprep.subr.mxu0 0.0
  %471 = vmatpush2.msra.mxu0 0.0
  %472 = vmatprep.subr.mxu0 0.0
  %473 = vmatpush2.msra.mxu0 0.0
  %474 = vmatprep.subr.mxu0 0.0
  %475 = vmatpush2.msra.mxu0 0.0
  %476 = vmatprep.subr.mxu0 0.0
  %477 = vmatpush2.msra.mxu0 0.0
  %478 = vmatprep.subr.mxu0 0.0
  %479 = vmatpush2.msra.mxu0 0.0
  %480 = vmatprep.subr.mxu0 0.0
  %481 = vmatpush2.msra.mxu0 0.0
  %482 = vmatprep.subr.mxu0 0.0
  %483 = vmatpush2.msra.mxu0 0.0
  %484 = vmatprep.mubr.f32.mxu0 0.0
  %485 = vmatmul.mubr.f32.gmra.mxu0 %v82
  %v486 = vpop.f32.mrf.mxu0
  %v487 = vadd.f32 0.0, %v486
  %v488 = vpop.f32.mrf.mxu0
  %v489 = vadd.f32 0.0, %v488
  %490 = vdwg.mxu0
  %491 = vmatprep.subr.mxu0 0.0
  %492 = vmatpush1.msra.mxu0 0.0
  %493 = vmatprep.subr.mxu0 0.0
  %494 = vmatpush1.msra.mxu0 0.0
  %495 = vmatprep.subr.mxu0 0.0
  %496 = vmatpush1.msra.mxu0 0.0
  %497 = vmatprep.subr.mxu0 0.0
  %498 = vmatpush1.msra.mxu0 0.0
  %499 = vmatprep.subr.mxu0 0.0
  %500 = vmatpush1.msra.mxu0 0.0
  %501 = vmatprep.subr.mxu0 0.0
  %502 = vmatpush1.msra.mxu0 0.0
  %503 = vmatprep.subr.mxu0 0.0
  %504 = vmatpush1.msra.mxu0 0.0
  %505 = vmatprep.subr.mxu0 0.0
  %506 = vmatpush1.msra.mxu0 0.0
  %507 = vmatprep.subr.mxu0 0.0
  %508 = vmatpush1.msra.mxu0 0.0
  %509 = vmatprep.subr.mxu0 0.0
  %510 = vmatpush1.msra.mxu0 0.0
  %511 = vmatprep.subr.mxu0 0.0
  %512 = vmatpush1.msra.mxu0 0.0
  %513 = vmatprep.subr.mxu0 0.0
  %514 = vmatpush1.msra.mxu0 0.0
  %515 = vmatprep.subr.mxu0 %v119
  %516 = vmatpush1.msra.mxu0 %v116
  %517 = vmatprep.subr.mxu0 %v57
  %518 = vmatpush1.msra.mxu0 %v56
  %519 = vmatprep.subr.mxu0 %v40
  %520 = vmatpush1.msra.mxu0 %v39
  %521 = vmatprep.subr.mxu0 %v23
  %522 = vmatpush1.msra.mxu0 %v22
  %523 = vmatprep.subr.mxu0 0.0
  %524 = vmatpush2.msra.mxu0 0.0
  %525 = vmatprep.subr.mxu0 0.0
  %526 = vmatpush2.msra.mxu0 0.0
  %527 = vmatprep.subr.mxu0 0.0
  %528 = vmatpush2.msra.mxu0 0.0
  %529 = vmatprep.subr.mxu0 0.0
  %530 = vmatpush2.msra.mxu0 0.0
  %531 = vmatprep.subr.mxu0 0.0
  %532 = vmatpush2.msra.mxu0 0.0
  %533 = vmatprep.subr.mxu0 0.0
  %534 = vmatpush2.msra.mxu0 0.0
  %535 = vmatprep.subr.mxu0 0.0
  %536 = vmatpush2.msra.mxu0 0.0
  %537 = vmatprep.subr.mxu0 0.0
  %538 = vmatpush2.msra.mxu0 0.0
  %539 = vmatprep.subr.mxu0 0.0
  %540 = vmatpush2.msra.mxu0 0.0
  %541 = vmatprep.subr.mxu0 0.0
  %542 = vmatpush2.msra.mxu0 0.0
  %543 = vmatprep.subr.mxu0 0.0
  %544 = vmatpush2.msra.mxu0 0.0
  %545 = vmatprep.subr.mxu0 0.0
  %546 = vmatpush2.msra.mxu0 0.0
  %547 = vmatprep.subr.mxu0 0.0
  %548 = vmatpush2.msra.mxu0 0.0
  %549 = vmatprep.subr.mxu0 0.0
  %550 = vmatpush2.msra.mxu0 0.0
  %551 = vmatprep.subr.mxu0 0.0
  %552 = vmatpush2.msra.mxu0 0.0
  %553 = vmatprep.subr.mxu0 0.0
  %554 = vmatpush2.msra.mxu0 0.0
  %555 = vmatprep.mubr.f32.mxu0 0.0
  %556 = vmatmul.mubr.f32.gmra.mxu0 %v82
  %v557 = vpop.f32.mrf.mxu0
  %v558 = vadd.f32 0.0, %v557
  %v559 = vpop.f32.mrf.mxu0
  %v560 = vadd.f32 0.0, %v559
  %561 = vdwg.mxu0
  %562 = vmatprep.subr.mxu0 0.0
  %563 = vmatpush1.msra.mxu0 0.0
  %564 = vmatprep.subr.mxu0 0.0
  %565 = vmatpush1.msra.mxu0 0.0
  %566 = vmatprep.subr.mxu0 0.0
  %567 = vmatpush1.msra.mxu0 0.0
  %568 = vmatprep.subr.mxu0 0.0
  %569 = vmatpush1.msra.mxu0 0.0
  %570 = vmatprep.subr.mxu0 0.0
  %571 = vmatpush1.msra.mxu0 0.0
  %572 = vmatprep.subr.mxu0 0.0
  %573 = vmatpush1.msra.mxu0 0.0
  %574 = vmatprep.subr.mxu0 0.0
  %575 = vmatpush1.msra.mxu0 0.0
  %576 = vmatprep.subr.mxu0 0.0
  %577 = vmatpush1.msra.mxu0 0.0
  %578 = vmatprep.subr.mxu0 0.0
  %579 = vmatpush1.msra.mxu0 0.0
  %580 = vmatprep.subr.mxu0 0.0
  %581 = vmatpush1.msra.mxu0 0.0
  %582 = vmatprep.subr.mxu0 0.0
  %583 = vmatpush1.msra.mxu0 0.0
  %584 = vmatprep.subr.mxu0 0.0
  %585 = vmatpush1.msra.mxu0 0.0
  %586 = vmatprep.subr.mxu0 %v125
  %587 = vmatpush1.msra.mxu0 %v122
  %588 = vmatprep.subr.mxu0 %v59
  %589 = vmatpush1.msra.mxu0 %v58
  %590 = vmatprep.subr.mxu0 %v42
  %591 = vmatpush1.msra.mxu0 %v41
  %592 = vmatprep.subr.mxu0 %v25
  %593 = vmatpush1.msra.mxu0 %v24
  %594 = vmatprep.subr.mxu0 0.0
  %595 = vmatpush2.msra.mxu0 0.0
  %596 = vmatprep.subr.mxu0 0.0
  %597 = vmatpush2.msra.mxu0 0.0
  %598 = vmatprep.subr.mxu0 0.0
  %599 = vmatpush2.msra.mxu0 0.0
  %600 = vmatprep.subr.mxu0 0.0
  %601 = vmatpush2.msra.mxu0 0.0
  %602 = vmatprep.subr.mxu0 0.0
  %603 = vmatpush2.msra.mxu0 0.0
  %604 = vmatprep.subr.mxu0 0.0
  %605 = vmatpush2.msra.mxu0 0.0
  %606 = vmatprep.subr.mxu0 0.0
  %607 = vmatpush2.msra.mxu0 0.0
  %608 = vmatprep.subr.mxu0 0.0
  %609 = vmatpush2.msra.mxu0 0.0
  %610 = vmatprep.subr.mxu0 0.0
  %611 = vmatpush2.msra.mxu0 0.0
  %612 = vmatprep.subr.mxu0 0.0
  %613 = vmatpush2.msra.mxu0 0.0
  %614 = vmatprep.subr.mxu0 0.0
  %615 = vmatpush2.msra.mxu0 0.0
  %616 = vmatprep.subr.mxu0 0.0
  %617 = vmatpush2.msra.mxu0 0.0
  %618 = vmatprep.subr.mxu0 0.0
  %619 = vmatpush2.msra.mxu0 0.0
  %620 = vmatprep.subr.mxu0 0.0
  %621 = vmatpush2.msra.mxu0 0.0
  %622 = vmatprep.subr.mxu0 0.0
  %623 = vmatpush2.msra.mxu0 0.0
  %624 = vmatprep.subr.mxu0 0.0
  %625 = vmatpush2.msra.mxu0 0.0
  %626 = vmatprep.mubr.f32.mxu0 0.0
  %627 = vmatmul.mubr.f32.gmra.mxu0 %v82
  %v628 = vpop.f32.mrf.mxu0
  %v629 = vadd.f32 0.0, %v628
  %v630 = vpop.f32.mrf.mxu0
  %v631 = vadd.f32 0.0, %v630
  %632 = vdwg.mxu0
  %633 = vmatprep.subr.mxu0 0.0
  %634 = vmatpush1.msra.mxu0 0.0
  %635 = vmatprep.subr.mxu0 0.0
  %636 = vmatpush1.msra.mxu0 0.0
  %637 = vmatprep.subr.mxu0 0.0
  %638 = vmatpush1.msra.mxu0 0.0
  %639 = vmatprep.subr.mxu0 0.0
  %640 = vmatpush1.msra.mxu0 0.0
  %641 = vmatprep.subr.mxu0 0.0
  %642 = vmatpush1.msra.mxu0 0.0
  %643 = vmatprep.subr.mxu0 0.0
  %644 = vmatpush1.msra.mxu0 0.0
  %645 = vmatprep.subr.mxu0 0.0
  %646 = vmatpush1.msra.mxu0 0.0
  %647 = vmatprep.subr.mxu0 0.0
  %648 = vmatpush1.msra.mxu0 0.0
  %649 = vmatprep.subr.mxu0 0.0
  %650 = vmatpush1.msra.mxu0 0.0
  %651 = vmatprep.subr.mxu0 0.0
  %652 = vmatpush1.msra.mxu0 0.0
  %653 = vmatprep.subr.mxu0 0.0
  %654 = vmatpush1.msra.mxu0 0.0
  %655 = vmatprep.subr.mxu0 0.0
  %656 = vmatpush1.msra.mxu0 0.0
  %657 = vmatprep.subr.mxu0 %v131
  %658 = vmatpush1.msra.mxu0 %v128
  %659 = vmatprep.subr.mxu0 %v61
  %660 = vmatpush1.msra.mxu0 %v60
  %661 = vmatprep.subr.mxu0 %v44
  %662 = vmatpush1.msra.mxu0 %v43
  %663 = vmatprep.subr.mxu0 %v27
  %664 = vmatpush1.msra.mxu0 %v26
  %665 = vmatprep.subr.mxu0 0.0
  %666 = vmatpush2.msra.mxu0 0.0
  %667 = vmatprep.subr.mxu0 0.0
  %668 = vmatpush2.msra.mxu0 0.0
  %669 = vmatprep.subr.mxu0 0.0
  %670 = vmatpush2.msra.mxu0 0.0
  %671 = vmatprep.subr.mxu0 0.0
  %672 = vmatpush2.msra.mxu0 0.0
  %673 = vmatprep.subr.mxu0 0.0
  %674 = vmatpush2.msra.mxu0 0.0
  %675 = vmatprep.subr.mxu0 0.0
  %676 = vmatpush2.msra.mxu0 0.0
  %677 = vmatprep.subr.mxu0 0.0
  %678 = vmatpush2.msra.mxu0 0.0
  %679 = vmatprep.subr.mxu0 0.0
  %680 = vmatpush2.msra.mxu0 0.0
  %681 = vmatprep.subr.mxu0 0.0
  %682 = vmatpush2.msra.mxu0 0.0
  %683 = vmatprep.subr.mxu0 0.0
  %684 = vmatpush2.msra.mxu0 0.0
  %685 = vmatprep.subr.mxu0 0.0
  %686 = vmatpush2.msra.mxu0 0.0
  %687 = vmatprep.subr.mxu0 0.0
  %688 = vmatpush2.msra.mxu0 0.0
  %689 = vmatprep.subr.mxu0 0.0
  %690 = vmatpush2.msra.mxu0 0.0
  %691 = vmatprep.subr.mxu0 0.0
  %692 = vmatpush2.msra.mxu0 0.0
  %693 = vmatprep.subr.mxu0 0.0
  %694 = vmatpush2.msra.mxu0 0.0
  %695 = vmatprep.subr.mxu0 0.0
  %696 = vmatpush2.msra.mxu0 0.0
  %697 = vmatprep.mubr.f32.mxu0 0.0
  %698 = vmatmul.mubr.f32.gmra.mxu0 %v82
  %v699 = vpop.f32.mrf.mxu0
  %v700 = vadd.f32 0.0, %v699
  %v701 = vpop.f32.mrf.mxu0
  %v702 = vadd.f32 0.0, %v701
  %703 = vdwg.mxu0
  %704 = vmatprep.subr.mxu0 0.0
  %705 = vmatpush1.msra.mxu0 0.0
  %706 = vmatprep.subr.mxu0 0.0
  %707 = vmatpush1.msra.mxu0 0.0
  %708 = vmatprep.subr.mxu0 0.0
  %709 = vmatpush1.msra.mxu0 0.0
  %710 = vmatprep.subr.mxu0 0.0
  %711 = vmatpush1.msra.mxu0 0.0
  %712 = vmatprep.subr.mxu0 0.0
  %713 = vmatpush1.msra.mxu0 0.0
  %714 = vmatprep.subr.mxu0 0.0
  %715 = vmatpush1.msra.mxu0 0.0
  %716 = vmatprep.subr.mxu0 0.0
  %717 = vmatpush1.msra.mxu0 0.0
  %718 = vmatprep.subr.mxu0 0.0
  %719 = vmatpush1.msra.mxu0 0.0
  %720 = vmatprep.subr.mxu0 0.0
  %721 = vmatpush1.msra.mxu0 0.0
  %722 = vmatprep.subr.mxu0 0.0
  %723 = vmatpush1.msra.mxu0 0.0
  %724 = vmatprep.subr.mxu0 0.0
  %725 = vmatpush1.msra.mxu0 0.0
  %726 = vmatprep.subr.mxu0 0.0
  %727 = vmatpush1.msra.mxu0 0.0
  %728 = vmatprep.subr.mxu0 0.0
  %729 = vmatpush1.msra.mxu0 %v134
  %730 = vmatprep.subr.mxu0 0.0
  %731 = vmatpush1.msra.mxu0 %v62
  %732 = vmatprep.subr.mxu0 0.0
  %733 = vmatpush1.msra.mxu0 %v45
  %734 = vmatprep.subr.mxu0 0.0
  %735 = vmatpush1.msra.mxu0 %v28
  %736 = vmatprep.subr.mxu0 0.0
  %737 = vmatpush2.msra.mxu0 0.0
  %738 = vmatprep.subr.mxu0 0.0
  %739 = vmatpush2.msra.mxu0 0.0
  %740 = vmatprep.subr.mxu0 0.0
  %741 = vmatpush2.msra.mxu0 0.0
  %742 = vmatprep.subr.mxu0 0.0
  %743 = vmatpush2.msra.mxu0 0.0
  %744 = vmatprep.subr.mxu0 0.0
  %745 = vmatpush2.msra.mxu0 0.0
  %746 = vmatprep.subr.mxu0 0.0
  %747 = vmatpush2.msra.mxu0 0.0
  %748 = vmatprep.subr.mxu0 0.0
  %749 = vmatpush2.msra.mxu0 0.0
  %750 = vmatprep.subr.mxu0 0.0
  %751 = vmatpush2.msra.mxu0 0.0
  %752 = vmatprep.subr.mxu0 0.0
  %753 = vmatpush2.msra.mxu0 0.0
  %754 = vmatprep.subr.mxu0 0.0
  %755 = vmatpush2.msra.mxu0 0.0
  %756 = vmatprep.subr.mxu0 0.0
  %757 = vmatpush2.msra.mxu0 0.0
  %758 = vmatprep.subr.mxu0 0.0
  %759 = vmatpush2.msra.mxu0 0.0
  %760 = vmatprep.subr.mxu0 0.0
  %761 = vmatpush2.msra.mxu0 0.0
  %762 = vmatprep.subr.mxu0 0.0
  %763 = vmatpush2.msra.mxu0 0.0
  %764 = vmatprep.subr.mxu0 0.0
  %765 = vmatpush2.msra.mxu0 0.0
  %766 = vmatprep.subr.mxu0 0.0
  %767 = vmatpush2.msra.mxu0 0.0
  %768 = vmatprep.mubr.f32.mxu0 0.0
  %769 = vmatmul.mubr.f32.gmra.mxu0 %v82
  %v770 = vpop.f32.mrf.mxu0
  %v771 = vadd.f32 0.0, %v770
  %v772 = vpop.f32.mrf.mxu0
  %773 = vdwg.mxu0
  %v791 = vcombine.low %v203, %v205
  %v792 = vcombine.low %v274, %v276
  %v793 = vcombine.low %v345, %v347
  %v794 = vcombine.low %v416, %v418
  %v796 = vunpack.c.l.s4 1966171168
  %v797 = vunpack.c.0.s8 %v796
  %v798 = vlaneseq
  %v799 = vshrl.u32 %v798, 7
  %v800 = vsub.s32 %v797, %v799
  %v801 = vrot.slane %v791, %v800
  %v803 = vunpack.c.l.s4 1966171168
  %v804 = vunpack.c.0.s8 %v803
  %v805 = vlaneseq
  %v806 = vshrl.u32 %v805, 7
  %v807 = vsub.s32 %v804, %v806
  %v808 = vrot.slane %v792, %v807
  %v810 = vunpack.c.l.s4 1966171168
  %v811 = vunpack.c.0.s8 %v810
  %v812 = vlaneseq
  %v813 = vshrl.u32 %v812, 7
  %v814 = vsub.s32 %v811, %v813
  %v815 = vrot.slane %v793, %v814
  %v817 = vunpack.c.l.s4 1966171168
  %v818 = vunpack.c.0.s8 %v817
  %v819 = vlaneseq
  %v820 = vshrl.u32 %v819, 7
  %v821 = vsub.s32 %v818, %v820
  %v822 = vrot.slane %v794, %v821
  %v823 = vcombine.low %v801, %v808
  %v824 = vcombine.low %v815, %v822
  %v826 = vunpack.c.l.s4 1966171168
  %v827 = vunpack.c.0.s8 %v826
  %v828 = vlaneseq
  %v829 = vshrl.u32 %v828, 7
  %v830 = vsub.s32 %v827, %v829
  %v831 = vrot.slane %v823, %v830
  %v833 = vunpack.c.l.s4 1966171168
  %v834 = vunpack.c.0.s8 %v833
  %v835 = vlaneseq
  %v836 = vshrl.u32 %v835, 7
  %v837 = vsub.s32 %v834, %v836
  %v838 = vrot.slane %v824, %v837
  %v839 = vcombine.low %v831, %v838
  %v840 = vcombine.low %v487, %v489
  %v841 = vcombine.low %v558, %v560
  %v842 = vcombine.low %v629, %v631
  %v843 = vcombine.low %v700, %v702
  %v845 = vunpack.c.l.s4 1966171168
  %v846 = vunpack.c.0.s8 %v845
  %v847 = vlaneseq
  %v848 = vshrl.u32 %v847, 7
  %v849 = vsub.s32 %v846, %v848
  %v850 = vrot.slane %v840, %v849
  %v852 = vunpack.c.l.s4 1966171168
  %v853 = vunpack.c.0.s8 %v852
  %v854 = vlaneseq
  %v855 = vshrl.u32 %v854, 7
  %v856 = vsub.s32 %v853, %v855
  %v857 = vrot.slane %v841, %v856
  %v859 = vunpack.c.l.s4 1966171168
  %v860 = vunpack.c.0.s8 %v859
  %v861 = vlaneseq
  %v862 = vshrl.u32 %v861, 7
  %v863 = vsub.s32 %v860, %v862
  %v864 = vrot.slane %v842, %v863
  %v866 = vunpack.c.l.s4 1966171168
  %v867 = vunpack.c.0.s8 %v866
  %v868 = vlaneseq
  %v869 = vshrl.u32 %v868, 7
  %v870 = vsub.s32 %v867, %v869
  %v871 = vrot.slane %v843, %v870
  %v872 = vcombine.low %v850, %v857
  %v873 = vcombine.low %v864, %v871
  %v875 = vunpack.c.l.s4 1966171168
  %v876 = vunpack.c.0.s8 %v875
  %v877 = vlaneseq
  %v878 = vshrl.u32 %v877, 7
  %v879 = vsub.s32 %v876, %v878
  %v880 = vrot.slane %v872, %v879
  %v882 = vunpack.c.l.s4 1966171168
  %v883 = vunpack.c.0.s8 %v882
  %v884 = vlaneseq
  %v885 = vshrl.u32 %v884, 7
  %v886 = vsub.s32 %v883, %v885
  %v887 = vrot.slane %v873, %v886
  %v888 = vcombine.low %v880, %v887
  %v890 = vunpack.c.l.s4 1966171168
  %v891 = vunpack.c.0.s8 %v890
  %v892 = vlaneseq
  %v893 = vshrl.u32 %v892, 7
  %v894 = vsub.s32 %v891, %v893
  %v895 = vrot.slane %v771, %v894
  %v897 = vunpack.c.l.s4 1966171168
  %v898 = vunpack.c.0.s8 %v897
  %v899 = vlaneseq
  %v900 = vshrl.u32 %v899, 7
  %v901 = vsub.s32 %v898, %v900
  %v902 = vrot.slane %v895, %v901
  %906 = vst [vmem:[%s2] sm:$0xff] %v839
  %907 = vst [vmem:[%s2 + $0x8] sm:$0xff] %v888
  %v908 = vlaneseq
  %vm909 = vcmp.ge.s32.totalorder %v908, 0
  %vm910 = vcmp.lt.s32.totalorder %v908, 128
  %vm911 = vmand %vm909, %vm910
  %912 = vst.msk [vmem:[%s2 + $0x10] sm:$0x1] %vm911, %v902
  // Predicated region
  $region10: #{apply_pitch_shift.7} parent=0 // pred_check
    _
  $region11: #{apply_pitch_shift.7} parent=0 // pred_check_branch
    %914 = sbr.rel (0) target = $region13
  $region12: #{apply_pitch_shift.7} parent=0 // pred_region
    _
  $region13: #{apply_pitch_shift.7} parent=0 // pred_fallthru
    _
  // Predicated region
  $region14: #{apply_pitch_shift.7} parent=0 // pred_check
    _
  $region15: #{apply_pitch_shift.7} parent=0 // pred_check_branch
    %916 = sbr.rel (0) target = $region17
  $region16: #{apply_pitch_shift.7} parent=0 // pred_region
    _
  $region17: #{apply_pitch_shift.7} parent=0 // pred_fallthru
    _

</llo_original>
